<compile_context>
chip_gen: v5e
topology: v5e:2x2
jax: 0.10.0
libtpu: 0.0.40
codegen_flags: <defaults>
</compile_context>

<pallas_src>
import functools
import math

import jax
import jax.numpy as jnp
import numpy as np
from jax.experimental import pallas as pl
from jax.experimental.pallas import tpu as pltpu

_NEG = -1e30  # finite "-inf" sentinel: keeps the online-logsumexp math NaN-free
_VMEM_BUDGET = 40 * 1024 * 1024  # sized for v7x's 64 MiB physical VMEM


def _round_up(x, m):
    return ((x + m - 1) // m) * m


def _circle_loss_kernel(xr_ref, xc_ref, yr_ref, yc_ref, o_ref, *scratch,
                        gamma, margin, n_valid, tile_i, tile_j, multi_k,
                        needs_valid):
    i = pl.program_id(0)
    j = pl.program_id(1)
    nj = pl.num_programs(1)

    if multi_k:
        acc_ref, stats_ref = scratch
        k = pl.program_id(2)
        nk = pl.num_programs(2)
        first_step = (j == 0) & (k == 0)
        last_k = k == nk - 1
        last_step = (j == nj - 1) & last_k
    else:
        (stats_ref,) = scratch
        first_step = j == 0
        last_step = j == nj - 1

    # Per-row online-logsumexp state, packed as [m_p, l_p, m_n, l_n] columns.
    # (Re)init at the first (j[, k]) step of each row tile; state is private to
    # the current i tile -> the i axis stays "parallel" (megacore on v7x).
    @pl.when(first_step)
    def _():
        neg_col = jnp.full((tile_i, 1), _NEG, jnp.float32)
        zero_col = jnp.zeros((tile_i, 1), jnp.float32)
        stats_ref[:, 0:1] = neg_col
        stats_ref[:, 1:2] = zero_col
        stats_ref[:, 2:3] = neg_col
        stats_ref[:, 3:4] = zero_col

    def epilogue(sim):
        # sim: (tile_i, tile_j) f32 similarity block.
        row_ids = i * tile_i + jax.lax.broadcasted_iota(jnp.int32, sim.shape, 0)
        col_ids = j * tile_j + jax.lax.broadcasted_iota(jnp.int32, sim.shape, 1)
        same = yr_ref[...] == yc_ref[...]       # (ti,1) vs (1,tj) -> (ti,tj)
        pos_core = same & (col_ids > row_ids)   # label_matrix.triu(diagonal=1)
        if needs_valid:
            valid = (row_ids < n_valid) & (col_ids < n_valid)
            is_pos = pos_core & valid
            is_neg = jnp.logical_not(pos_core) & valid   # faithful: ~triu(label,1)
        else:
            is_pos = pos_core
            is_neg = jnp.logical_not(pos_core)

        # Fused logit: pos and neg are disjoint, so build one selected logit.
        alpha = jnp.maximum(
            jnp.where(is_pos, (1.0 + margin) - sim, sim + margin), 0.0)
        delta = jnp.where(is_pos, 1.0 - margin, margin)
        coef = jnp.where(is_pos, -gamma, gamma)
        logit = coef * alpha * (sim - delta)

        m_p = stats_ref[:, 0:1]
        l_p = stats_ref[:, 1:2]
        m_n = stats_ref[:, 2:3]
        l_n = stats_ref[:, 3:4]

        masked_p = jnp.where(is_pos, logit, _NEG)
        masked_n = jnp.where(is_neg, logit, _NEG)
        m_p_new = jnp.maximum(m_p, jnp.max(masked_p, axis=-1, keepdims=True))
        m_n_new = jnp.maximum(m_n, jnp.max(masked_n, axis=-1, keepdims=True))

        # One full-tile exp; split contributions afterwards.  The _NEG guard
        # keeps all-masked rows (padding / no-positive rows) at exactly zero.
        shift = jnp.where(is_pos, m_p_new, m_n_new)
        guarded = jnp.where(valid, logit, _NEG) if needs_valid else logit
        e = jnp.exp(guarded - shift)
        contrib_p = jnp.where(is_pos, e, 0.0)
        contrib_n = jnp.where(is_neg, e, 0.0)

        stats_ref[:, 0:1] = m_p_new
        stats_ref[:, 1:2] = (l_p * jnp.exp(m_p - m_p_new)
                             + jnp.sum(contrib_p, axis=-1, keepdims=True))
        stats_ref[:, 2:3] = m_n_new
        stats_ref[:, 3:4] = (l_n * jnp.exp(m_n - m_n_new)
                             + jnp.sum(contrib_n, axis=-1, keepdims=True))

    # MXU: contract the lane (feature) dims of both operands directly.
    if multi_k:
        @pl.when(k == 0)
        def _():
            acc_ref[...] = jnp.zeros_like(acc_ref)

        acc_ref[...] += jax.lax.dot_general(
            xr_ref[...], xc_ref[...],
            dimension_numbers=(((1,), (1,)), ((), ())),
            preferred_element_type=jnp.float32)

        @pl.when(last_k)
        def _():
            epilogue(acc_ref[...])
    else:
        sim = jax.lax.dot_general(
            xr_ref[...], xc_ref[...],
            dimension_numbers=(((1,), (1,)), ((), ())),
            preferred_element_type=jnp.float32)
        epilogue(sim)

    # Single packed store of the per-row partial logsumexp stats per row tile.
    @pl.when(last_step)
    def _():
        o_ref[...] = stats_ref[...]


def circle_loss(x, y, *, gamma, margin, tile_rows=None, tile_cols=None,
                mxu_dtype=None):
    """x: (N, D) embeddings (extra dims flattened); y: (N,) integer labels.

    mxu_dtype=jnp.bfloat16 casts the contraction inputs to bf16 (recommended
    on v5e; accumulation stays f32) at the cost of bf16 rounding in sim.
    """
    x2 = x.reshape(x.shape[0], -1)
    if mxu_dtype is not None:
        x2 = x2.astype(mxu_dtype)
    elif x2.dtype not in (jnp.bfloat16, jnp.float32):
        x2 = x2.astype(jnp.float32)
    n, d = x2.shape
    itemsize = np.dtype(x2.dtype).itemsize

    # Tile selection: big row tiles for arithmetic intensity, but keep >= 2 row
    # tiles for N > 256 so the "parallel" i axis feeds both v7x TensorCores.
    if tile_rows is not None and tile_cols is not None:
        ti, tj = int(tile_rows), int(tile_cols)
    elif n <= 256:
        ti = tj = _round_up(max(n, 1), 128)
    elif n <= 1024:
        ti, tj = 256, 256
    else:
        ti, tj = 512, 256
    assert ti % 128 == 0 and tj % 128 == 0

    n_pad = _round_up(n, (ti * tj) // math.gcd(ti, tj))

    # Collapse the K axis whenever the (double-buffered) row + col feature
    # stripes fit the VMEM budget; otherwise fall back to a K-inner accumulator.
    d128 = _round_up(max(d, 1), 128)
    stripe_bytes = 2 * (ti + tj) * d128 * itemsize
    if stripe_bytes <= _VMEM_BUDGET:
        tk = d128
        multi_k = False
    else:
        per_col = 2 * (ti + tj) * itemsize
        tk = max(128, min(d128,
                          ((_VMEM_BUDGET - ti * tj * 4) // per_col) // 128 * 128))
        multi_k = True
    d_pad = _round_up(max(d, 1), tk)

    # Skip the O(N*D) padding copy when the inputs are already tile-aligned.
    if n_pad == n and d_pad == d:
        xp = x2
    else:
        xp = jnp.zeros((n_pad, d_pad), dtype=x2.dtype).at[:n, :d].set(x2)
    if n_pad == n:
        yp = y.astype(jnp.int32)
    else:
        yp = jnp.full((n_pad,), -1, dtype=jnp.int32).at[:n].set(y.astype(jnp.int32))
    y_row = yp.reshape(n_pad, 1)
    y_col = yp.reshape(1, n_pad)

    mt_i = n_pad // ti
    mt_j = n_pad // tj
    kt = d_pad // tk
    needs_valid = (n != n_pad)

    kernel = functools.partial(
        _circle_loss_kernel, gamma=float(gamma), margin=float(margin),
        n_valid=n, tile_i=ti, tile_j=tj, multi_k=multi_k,
        needs_valid=needs_valid)

    if multi_k:
        grid = (mt_i, mt_j, kt)
        in_specs = [
            pl.BlockSpec((ti, tk), lambda i, j, k: (i, k)),   # x, row stripe
            pl.BlockSpec((tj, tk), lambda i, j, k: (j, k)),   # x, col stripe
            pl.BlockSpec((ti, 1), lambda i, j, k: (i, 0)),    # labels (rows)
            pl.BlockSpec((1, tj), lambda i, j, k: (0, j)),    # labels (cols)
        ]
        out_spec = pl.BlockSpec((ti, 4), lambda i, j, k: (i, 0))
        scratch = [pltpu.VMEM((ti, tj), jnp.float32),         # sim accumulator
                   pltpu.VMEM((ti, 4), jnp.float32)]          # packed row stats
        dims = ("parallel", "arbitrary", "arbitrary")
    else:
        grid = (mt_i, mt_j)
        in_specs = [
            pl.BlockSpec((ti, tk), lambda i, j: (i, 0)),      # resident across j
            pl.BlockSpec((tj, tk), lambda i, j: (j, 0)),
            pl.BlockSpec((ti, 1), lambda i, j: (i, 0)),
            pl.BlockSpec((1, tj), lambda i, j: (0, j)),
        ]
        out_spec = pl.BlockSpec((ti, 4), lambda i, j: (i, 0))
        scratch = [pltpu.VMEM((ti, 4), jnp.float32)]          # packed row stats
        dims = ("parallel", "arbitrary")

    vmem_est = (2 * (ti + tj) * tk * itemsize
                + (ti * tj * 4 if multi_k else 0)
                + 3 * ti * 128 * 4
                + 4 * (ti + tj) * 128)
    vmem_limit = int(min(48 * 1024 * 1024,
                         max(32 * 1024 * 1024, 2 * vmem_est)))

    xr_reads = mt_j if multi_k else 1
    cost = pl.CostEstimate(
        flops=2 * n_pad * n_pad * d_pad,
        transcendentals=n_pad * n_pad,
        bytes_accessed=(xr_reads + mt_i) * n_pad * d_pad * itemsize + n_pad * 16)

    stats = pl.pallas_call(
        kernel,
        out_shape=jax.ShapeDtypeStruct((n_pad, 4), jnp.float32),
        grid=grid,
        in_specs=in_specs,
        out_specs=out_spec,
        scratch_shapes=scratch,
        compiler_params=pltpu.CompilerParams(
            dimension_semantics=dims,
            vmem_limit_bytes=vmem_limit),
        cost_estimate=cost,
    )(xp, xp, y_row, y_col)

    # Tiny O(N) final combine of per-row partial logsumexp stats (plain JAX).
    def _combine(m, l):
        gm = jnp.max(m)
        return gm + jnp.log(jnp.sum(l * jnp.exp(m - gm)))

    lse_p = _combine(stats[:, 0], stats[:, 1])
    lse_n = _combine(stats[:, 2], stats[:, 3])
    # Note: when no positive pair exists the loss is NaN, matching the reference.
    # TODO(synk): reference module also print()s the loss; debug print omitted.
    return jnp.log(1.0 + lse_n + lse_p)


def _reference_numpy(x, y, gamma, margin):
    xf = np.asarray(x, dtype=np.float64).reshape(x.shape[0], -1)
    yv = np.asarray(y)
    sim = xf @ xf.T
    label = yv[:, None] == yv[None, :]
    pos = np.triu(label, k=1)
    neg = ~pos
    sp = sim[pos]
    sn = sim[neg]
    alpha_p = np.maximum(-sp + 1.0 + margin, 0.0)
    alpha_n = np.maximum(sn + margin, 0.0)
    delta_p = 1.0 - margin
    delta_n = margin
    logit_p = -gamma * alpha_p * (sp - delta_p)
    logit_n = gamma * alpha_n * (sn - delta_n)

    def lse(v):
        if v.size == 0:
            return -np.inf
        m = v.max()
        return m + np.log(np.sum(np.exp(v - m)))

    return np.log(1.0 + lse(logit_n) + lse(logit_p))


if __name__ == "__main__":
    gamma, margin = 32.0, 0.25

    key = jax.random.PRNGKey(0)
    kx, ky = jax.random.split(key)
    n, d = 32, 64
    x = jax.random.normal(kx, (n, d), dtype=jnp.float32)
    x = x / jnp.linalg.norm(x, axis=-1, keepdims=True)   # typical circle-loss usage
    y = jax.random.randint(ky, (n,), 0, 4, dtype=jnp.int32)  # 4 classes -> positives exist

    loss = circle_loss(x, y, gamma=gamma, margin=margin)
    loss = jax.block_until_ready(loss)

    ref = _reference_numpy(np.asarray(x), np.asarray(y), gamma, margin)
    np.testing.assert_allclose(float(loss), float(ref), rtol=1e-3, atol=1e-3,
                               equal_nan=True)
    print("KERNEL_OK")
</pallas_src>

<mosaic_0001>
module attributes {stable_mosaic.version = 11 : i64} {
  func.func @_circle_loss_kernel(%arg0: i32, %arg1: i32, %arg2: memref<128x128xf32, #tpu.memory_space<vmem>>, %arg3: memref<128x128xf32, #tpu.memory_space<vmem>>, %arg4: memref<128x1xi32, #tpu.memory_space<vmem>>, %arg5: memref<1x128xi32, #tpu.memory_space<vmem>>, %arg6: memref<128x4xf32, #tpu.memory_space<vmem>>, %arg7: memref<128x4xf32, #tpu.memory_space<vmem>>) attributes {dimension_semantics = [#tpu.dimension_semantics<parallel>, #tpu.dimension_semantics<arbitrary>], iteration_bounds = array<i64: 1, 1>, scalar_prefetch = 0 : i64, scratch_operands = 1 : i64, tpu.core_type = #tpu.core_type<tc>, window_params = [{transform_indices = @transform_0, window_bounds = array<i64: 128, 128>}, {transform_indices = @transform_1, window_bounds = array<i64: 128, 128>}, {transform_indices = @transform_2, window_bounds = array<i64: 128, 1>}, {transform_indices = @transform_3, window_bounds = array<i64: 1, 128>}, {transform_indices = @transform_4, window_bounds = array<i64: 128, 4>}]} {
    %c0_i32 = arith.constant 0 : i32
    %0 = arith.cmpi eq, %arg1, %c0_i32 : i32
    %c0_i32_0 = arith.constant 0 : i32
    %1 = arith.cmpi eq, %arg1, %c0_i32_0 : i32
    %2 = arith.extui %0 : i1 to i32
    %c0_i32_1 = arith.constant 0 : i32
    %3 = arith.cmpi ne, %2, %c0_i32_1 : i32
    scf.if %3 {
      %cst_42 = arith.constant -1.000000e+30 : f32
      %91 = vector.broadcast %cst_42 : f32 to vector<128x1xf32>
      %cst_43 = arith.constant 0.000000e+00 : f32
      %92 = vector.broadcast %cst_43 : f32 to vector<128x1xf32>
      %c0_44 = arith.constant 0 : index
      %c0_45 = arith.constant 0 : index
      %93 = vector.load %arg7[%c0_44, %c0_45] : memref<128x4xf32, #tpu.memory_space<vmem>>, vector<128x1xf32>
      tpu.vector_store %arg7[%c0_44, %c0_45], %91 {strides = array<i32>} : memref<128x4xf32, #tpu.memory_space<vmem>>, vector<128x1xf32>,
      %c0_46 = arith.constant 0 : index
      %c1_47 = arith.constant 1 : index
      %94 = vector.load %arg7[%c0_46, %c1_47] : memref<128x4xf32, #tpu.memory_space<vmem>>, vector<128x1xf32>
      tpu.vector_store %arg7[%c0_46, %c1_47], %92 {strides = array<i32>} : memref<128x4xf32, #tpu.memory_space<vmem>>, vector<128x1xf32>,
      %c0_48 = arith.constant 0 : index
      %c2_49 = arith.constant 2 : index
      %95 = vector.load %arg7[%c0_48, %c2_49] : memref<128x4xf32, #tpu.memory_space<vmem>>, vector<128x1xf32>
      tpu.vector_store %arg7[%c0_48, %c2_49], %91 {strides = array<i32>} : memref<128x4xf32, #tpu.memory_space<vmem>>, vector<128x1xf32>,
      %c0_50 = arith.constant 0 : index
      %c3_51 = arith.constant 3 : index
      %96 = vector.load %arg7[%c0_50, %c3_51] : memref<128x4xf32, #tpu.memory_space<vmem>>, vector<128x1xf32>
      tpu.vector_store %arg7[%c0_50, %c3_51], %92 {strides = array<i32>} : memref<128x4xf32, #tpu.memory_space<vmem>>, vector<128x1xf32>,
    } else {
    }
    %c0 = arith.constant 0 : index
    %c0_2 = arith.constant 0 : index
    %4 = vector.load %arg2[%c0, %c0_2] : memref<128x128xf32, #tpu.memory_space<vmem>>, vector<128x128xf32>
    %c0_3 = arith.constant 0 : index
    %c0_4 = arith.constant 0 : index
    %5 = vector.load %arg3[%c0_3, %c0_4] : memref<128x128xf32, #tpu.memory_space<vmem>>, vector<128x128xf32>
    %cst = arith.constant dense<0.000000e+00> : vector<128x128xf32>
    %6 = tpu.matmul %4, %5, %cst {dimension_numbers = #tpu.dot_dimension_numbers<[1], [1], [0], [0], [0, 0, 1, 0], [], []>} : vector<128x128xf32>, vector<128x128xf32>, vector<128x128xf32> -> vector<128x128xf32>
    %c128_i32 = arith.constant 128 : i32
    %7 = arith.muli %arg0, %c128_i32 : i32
    %8 = tpu.iota {dimensions = array<i32: 0>} : vector<128x128xi32>
    %9 = vector.broadcast %7 : i32 to vector<128x128xi32>
    %10 = arith.addi %9, %8 : vector<128x128xi32>
    %c128_i32_5 = arith.constant 128 : i32
    %11 = arith.muli %arg1, %c128_i32_5 : i32
    %12 = tpu.iota {dimensions = array<i32: 1>} : vector<128x128xi32>
    %13 = vector.broadcast %11 : i32 to vector<128x128xi32>
    %14 = arith.addi %13, %12 : vector<128x128xi32>
    %c0_6 = arith.constant 0 : index
    %c0_7 = arith.constant 0 : index
    %15 = vector.load %arg4[%c0_6, %c0_7] : memref<128x1xi32, #tpu.memory_space<vmem>>, vector<128x1xi32>
    %c0_8 = arith.constant 0 : index
    %c0_9 = arith.constant 0 : index
    %16 = vector.load %arg5[%c0_8, %c0_9] : memref<1x128xi32, #tpu.memory_space<vmem>>, vector<1x128xi32>
    %17 = vector.broadcast %15 : vector<128x1xi32> to vector<128x128xi32>
    %18 = vector.broadcast %16 : vector<1x128xi32> to vector<128x128xi32>
    %19 = arith.cmpi eq, %17, %18 : vector<128x128xi32>
    %20 = arith.cmpi sgt, %14, %10 : vector<128x128xi32>
    %21 = arith.andi %19, %20 : vector<128x128xi1>
    %c32_i32 = arith.constant 32 : i32
    %22 = vector.broadcast %c32_i32 : i32 to vector<128x128xi32>
    %23 = arith.cmpi slt, %10, %22 : vector<128x128xi32>
    %c32_i32_10 = arith.constant 32 : i32
    %24 = vector.broadcast %c32_i32_10 : i32 to vector<128x128xi32>
    %25 = arith.cmpi slt, %14, %24 : vector<128x128xi32>
    %26 = arith.andi %23, %25 : vector<128x128xi1>
    %27 = arith.andi %21, %26 : vector<128x128xi1>
    %cst_11 = arith.constant dense<true> : vector<128x128xi1>
    %28 = arith.xori %21, %cst_11 : vector<128x128xi1>
    %29 = arith.andi %28, %26 : vector<128x128xi1>
    %cst_12 = arith.constant 1.250000e+00 : f32
    %30 = vector.broadcast %cst_12 : f32 to vector<128x128xf32>
    %31 = arith.subf %30, %6 : vector<128x128xf32>
    %cst_13 = arith.constant 2.500000e-01 : f32
    %32 = vector.broadcast %cst_13 : f32 to vector<128x128xf32>
    %33 = arith.addf %6, %32 : vector<128x128xf32>
    %34 = arith.select %27, %31, %33 : vector<128x128xi1>, vector<128x128xf32>
    %cst_14 = arith.constant 0.000000e+00 : f32
    %35 = vector.broadcast %cst_14 : f32 to vector<128x128xf32>
    %36 = arith.maximumf %34, %35 : vector<128x128xf32>
    %cst_15 = arith.constant 7.500000e-01 : f32
    %cst_16 = arith.constant 2.500000e-01 : f32
    %37 = vector.broadcast %cst_15 : f32 to vector<128x128xf32>
    %38 = vector.broadcast %cst_16 : f32 to vector<128x128xf32>
    %39 = arith.select %27, %37, %38 : vector<128x128xi1>, vector<128x128xf32>
    %cst_17 = arith.constant -3.200000e+01 : f32
    %cst_18 = arith.constant 3.200000e+01 : f32
    %40 = vector.broadcast %cst_17 : f32 to vector<128x128xf32>
    %41 = vector.broadcast %cst_18 : f32 to vector<128x128xf32>
    %42 = arith.select %27, %40, %41 : vector<128x128xi1>, vector<128x128xf32>
    %43 = arith.mulf %42, %36 : vector<128x128xf32>
    %44 = arith.subf %6, %39 : vector<128x128xf32>
    %45 = arith.mulf %43, %44 : vector<128x128xf32>
    %c0_19 = arith.constant 0 : index
    %c0_20 = arith.constant 0 : index
    %46 = vector.load %arg7[%c0_19, %c0_20] : memref<128x4xf32, #tpu.memory_space<vmem>>, vector<128x1xf32>
    %c0_21 = arith.constant 0 : index
    %c1 = arith.constant 1 : index
    %47 = vector.load %arg7[%c0_21, %c1] : memref<128x4xf32, #tpu.memory_space<vmem>>, vector<128x1xf32>
    %c0_22 = arith.constant 0 : index
    %c2 = arith.constant 2 : index
    %48 = vector.load %arg7[%c0_22, %c2] : memref<128x4xf32, #tpu.memory_space<vmem>>, vector<128x1xf32>
    %c0_23 = arith.constant 0 : index
    %c3 = arith.constant 3 : index
    %49 = vector.load %arg7[%c0_23, %c3] : memref<128x4xf32, #tpu.memory_space<vmem>>, vector<128x1xf32>
    %cst_24 = arith.constant -1.000000e+30 : f32
    %50 = vector.broadcast %cst_24 : f32 to vector<128x128xf32>
    %51 = arith.select %27, %45, %50 : vector<128x128xi1>, vector<128x128xf32>
    %cst_25 = arith.constant -1.000000e+30 : f32
    %52 = vector.broadcast %cst_25 : f32 to vector<128x128xf32>
    %53 = arith.select %29, %45, %52 : vector<128x128xi1>, vector<128x128xf32>
    %cst_26 = arith.constant dense<0xFF800000> : vector<128xf32>
    %54 = vector.multi_reduction <maximumf>, %51, %cst_26 [1] : vector<128x128xf32> to vector<128xf32>
    %55 = vector.shape_cast %54 : vector<128xf32> to vector<128x1xf32>
    %56 = arith.maximumf %46, %55 : vector<128x1xf32>
    %cst_27 = arith.constant dense<0xFF800000> : vector<128xf32>
    %57 = vector.multi_reduction <maximumf>, %53, %cst_27 [1] : vector<128x128xf32> to vector<128xf32>
    %58 = vector.shape_cast %57 : vector<128xf32> to vector<128x1xf32>
    %59 = arith.maximumf %48, %58 : vector<128x1xf32>
    %60 = vector.shape_cast %56 : vector<128x1xf32> to vector<128x1xf32>
    %61 = vector.broadcast %60 : vector<128x1xf32> to vector<128x128xf32>
    %62 = vector.shape_cast %59 : vector<128x1xf32> to vector<128x1xf32>
    %63 = vector.broadcast %62 : vector<128x1xf32> to vector<128x128xf32>
    %64 = arith.select %27, %61, %63 : vector<128x128xi1>, vector<128x128xf32>
    %cst_28 = arith.constant -1.000000e+30 : f32
    %65 = vector.broadcast %cst_28 : f32 to vector<128x128xf32>
    %66 = arith.select %26, %45, %65 : vector<128x128xi1>, vector<128x128xf32>
    %67 = arith.subf %66, %64 : vector<128x128xf32>
    %68 = math.exp %67 : vector<128x128xf32>
    %cst_29 = arith.constant 0.000000e+00 : f32
    %69 = vector.broadcast %cst_29 : f32 to vector<128x128xf32>
    %70 = arith.select %27, %68, %69 : vector<128x128xi1>, vector<128x128xf32>
    %cst_30 = arith.constant 0.000000e+00 : f32
    %71 = vector.broadcast %cst_30 : f32 to vector<128x128xf32>
    %72 = arith.select %29, %68, %71 : vector<128x128xi1>, vector<128x128xf32>
    %c0_31 = arith.constant 0 : index
    %c0_32 = arith.constant 0 : index
    %73 = vector.load %arg7[%c0_31, %c0_32] : memref<128x4xf32, #tpu.memory_space<vmem>>, vector<128x1xf32>
    tpu.vector_store %arg7[%c0_31, %c0_32], %56 {strides = array<i32>} : memref<128x4xf32, #tpu.memory_space<vmem>>, vector<128x1xf32>,
    %74 = arith.subf %46, %56 : vector<128x1xf32>
    %75 = math.exp %74 : vector<128x1xf32>
    %76 = arith.mulf %47, %75 : vector<128x1xf32>
    %cst_33 = arith.constant dense<0.000000e+00> : vector<128xf32>
    %77 = vector.multi_reduction <add>, %70, %cst_33 [1] : vector<128x128xf32> to vector<128xf32>
    %78 = vector.shape_cast %77 : vector<128xf32> to vector<128x1xf32>
    %79 = arith.addf %76, %78 : vector<128x1xf32>
    %c0_34 = arith.constant 0 : index
    %c1_35 = arith.constant 1 : index
    %80 = vector.load %arg7[%c0_34, %c1_35] : memref<128x4xf32, #tpu.memory_space<vmem>>, vector<128x1xf32>
    tpu.vector_store %arg7[%c0_34, %c1_35], %79 {strides = array<i32>} : memref<128x4xf32, #tpu.memory_space<vmem>>, vector<128x1xf32>,
    %c0_36 = arith.constant 0 : index
    %c2_37 = arith.constant 2 : index
    %81 = vector.load %arg7[%c0_36, %c2_37] : memref<128x4xf32, #tpu.memory_space<vmem>>, vector<128x1xf32>
    tpu.vector_store %arg7[%c0_36, %c2_37], %59 {strides = array<i32>} : memref<128x4xf32, #tpu.memory_space<vmem>>, vector<128x1xf32>,
    %82 = arith.subf %48, %59 : vector<128x1xf32>
    %83 = math.exp %82 : vector<128x1xf32>
    %84 = arith.mulf %49, %83 : vector<128x1xf32>
    %cst_38 = arith.constant dense<0.000000e+00> : vector<128xf32>
    %85 = vector.multi_reduction <add>, %72, %cst_38 [1] : vector<128x128xf32> to vector<128xf32>
    %86 = vector.shape_cast %85 : vector<128xf32> to vector<128x1xf32>
    %87 = arith.addf %84, %86 : vector<128x1xf32>
    %c0_39 = arith.constant 0 : index
    %c3_40 = arith.constant 3 : index
    %88 = vector.load %arg7[%c0_39, %c3_40] : memref<128x4xf32, #tpu.memory_space<vmem>>, vector<128x1xf32>
    tpu.vector_store %arg7[%c0_39, %c3_40], %87 {strides = array<i32>} : memref<128x4xf32, #tpu.memory_space<vmem>>, vector<128x1xf32>,
    %89 = arith.extui %1 : i1 to i32
    %c0_i32_41 = arith.constant 0 : i32
    %90 = arith.cmpi ne, %89, %c0_i32_41 : i32
    scf.if %90 {
      %c0_42 = arith.constant 0 : index
      %c0_43 = arith.constant 0 : index
      %91 = vector.load %arg7[%c0_42, %c0_43] : memref<128x4xf32, #tpu.memory_space<vmem>>, vector<128x4xf32>
      %c0_44 = arith.constant 0 : index
      %c0_45 = arith.constant 0 : index
      %92 = vector.load %arg6[%c0_44, %c0_45] : memref<128x4xf32, #tpu.memory_space<vmem>>, vector<128x4xf32>
      tpu.vector_store %arg6[%c0_44, %c0_45], %91 {strides = array<i32>} : memref<128x4xf32, #tpu.memory_space<vmem>>, vector<128x4xf32>,
    } else {
    }
    return
  }
  func.func @transform_0(%arg0: i32, %arg1: i32) -> (i32, i32) {
    %c0_i32 = arith.constant 0 : i32
    %c0_i32_0 = arith.constant 0 : i32
    return %arg0, %c0_i32 : i32, i32
  }
  func.func @transform_1(%arg0: i32, %arg1: i32) -> (i32, i32) {
    %c0_i32 = arith.constant 0 : i32
    %c0_i32_0 = arith.constant 0 : i32
    return %arg1, %c0_i32 : i32, i32
  }
  func.func @transform_2(%arg0: i32, %arg1: i32) -> (i32, i32) {
    %c0_i32 = arith.constant 0 : i32
    %c0_i32_0 = arith.constant 0 : i32
    return %arg0, %c0_i32 : i32, i32
  }
  func.func @transform_3(%arg0: i32, %arg1: i32) -> (i32, i32) {
    %c0_i32 = arith.constant 0 : i32
    %c0_i32_0 = arith.constant 0 : i32
    return %c0_i32, %arg1 : i32, i32
  }
  func.func @transform_4(%arg0: i32, %arg1: i32) -> (i32, i32) {
    %c0_i32 = arith.constant 0 : i32
    %c0_i32_0 = arith.constant 0 : i32
    return %arg0, %c0_i32 : i32, i32
  }
}

</mosaic_0001>

<llo_original>
// kernel: tpu_custom_call.1
$region0: #{tpu_custom_call.1}
  #allocation0 [shape = 'u32[]', space=smem, size = 0x4, offset = 0x4, fixed_abs, tag = 'smem constant byte address 0x4 - core index']
  #allocation1 [shape = 'u32[72,128]{1,0:T(1,128)}', space=vmem, size = 0x9000, scoped, tag = 'internal scratch']
  #allocation2 [shape = 'f32[128,4]{1,0:T(8,128)}', space=vmem, size = 0x10000, scoped, tag = 'scratch operand']
  %s0 = inlined_call_operand.vmem [shape: f32[128,128], index: 0, kind: input, shape index: {}]
  %s1 = inlined_call_operand.hbm [shape: f32[128,128], index: 1, kind: input, shape index: {}]
  %s2 = inlined_call_operand.vmem [shape: s32[128,1], index: 2, kind: input, shape index: {}]
  %s3 = inlined_call_operand.vmem [shape: s32[1,128], index: 3, kind: input, shape index: {}]
  %s4 = inlined_call_operand.vmem [shape: f32[128,4], index: 4, kind: output, shape index: {}]
  %s5 = sld [smem:[#allocation0]]
  $region38: #{tpu_custom_call.1} parent=0
    _
  %s7 = ssub.s32 1, %s5
  %s8 = scalar_select 0, %s7, %s5
  $region1: #{tpu_custom_call.1} parent=0
    #allocation3 [shape = 'u8[65536]{0}', space=vmem, size = 0x10000, scoped, tag = 'input window, operand 1, single buffered']
    #allocation4 [shape = 's32[1]{0}', space=sflag, size = 0x4, scoped, tag = 'scoped memory for tpu_custom_call.1']
    %9 = vsyncpa [#allocation4], 0
    // Predicated region
    $region2: #{tpu_custom_call.1} parent=1 // pred_check
      _
    $region3: #{tpu_custom_call.1} parent=1 // pred_check_branch
      %11 = sbr.rel (0) target = $region5
    $region4: #{tpu_custom_call.1} parent=1 // pred_region
      _
    $region5: #{tpu_custom_call.1} parent=1 // pred_fallthru
      _
    // Predicated region
    $region6: #{tpu_custom_call.1} parent=1 // pred_check
      _
    $region7: #{tpu_custom_call.1} parent=1 // pred_check_branch
      %13 = sbr.rel (0) target = $region9
    $region8: #{tpu_custom_call.1} parent=1 // pred_region
      %15 = vsyncadd [#allocation4], 0
      %s16 = sshll.u32 %s1, 4
      %s17 = int_to_ptr.hbm [resolvable:$true] %s16
      %s18 = sshll.u32 [#allocation3], 4
      %s19 = int_to_ptr.vmem [resolvable:$true] %s18
      %24 = dma.hbm_to_vmem [thread:$0]  %s17, 2048, %s19, [#allocation4], 128, 128, 8
    $region9: #{tpu_custom_call.1} parent=1 // pred_fallthru
      _
    // Predicated region
    $region10: #{tpu_custom_call.1} parent=1 // pred_check
      _
    $region11: #{tpu_custom_call.1} parent=1 // pred_check_branch
      %26 = sbr.rel (0) target = $region13
    $region12: #{tpu_custom_call.1} parent=1 // pred_region
      _
    $region13: #{tpu_custom_call.1} parent=1 // pred_fallthru
      _
    // Predicated region
    $region14: #{tpu_custom_call.1} parent=1 // pred_check
      _
    $region15: #{tpu_custom_call.1} parent=1 // pred_check_branch
      %28 = sbr.rel (0) target = $region17
    $region16: #{tpu_custom_call.1} parent=1 // pred_region
      _
    $region17: #{tpu_custom_call.1} parent=1 // pred_fallthru
      _
    // Predicated region
    $region18: #{tpu_custom_call.1} parent=1 // pred_check
      _
    $region19: #{tpu_custom_call.1} parent=1 // pred_check_branch
      %30 = sbr.rel (0) target = $region21
    $region20: #{tpu_custom_call.1} parent=1 // pred_region
      %32 = dma.done [#allocation4], 2048
    $region21: #{tpu_custom_call.1} parent=1 // pred_fallthru
      _
    %p33 = scmp.eq.s32.totalorder 0, 0
    // Predicated region
    $region22: #{tpu_custom_call.1} parent=1 // pred_check
      %p34 = pneg %p33
    $region23: #{tpu_custom_call.1} parent=1 // pred_check_branch
      %36 = sbr.rel (%p34) target = $region25
    $region24: #{tpu_custom_call.1} parent=1 // pred_region
      %vm37 = vcmask 7168
      %38 = vst.msk [vmem:[#allocation2] sm:$0xff] %vm37, -1e+30
      %39 = vst.msk [vmem:[#allocation2 + $0x8] sm:$0xff] %vm37, -1e+30
      %40 = vst.msk [vmem:[#allocation2 + $0x10] sm:$0xff] %vm37, -1e+30
      %41 = vst.msk [vmem:[#allocation2 + $0x18] sm:$0xff] %vm37, -1e+30
      %42 = vst.msk [vmem:[#allocation2 + $0x20] sm:$0xff] %vm37, -1e+30
      %43 = vst.msk [vmem:[#allocation2 + $0x28] sm:$0xff] %vm37, -1e+30
      %44 = vst.msk [vmem:[#allocation2 + $0x30] sm:$0xff] %vm37, -1e+30
      %45 = vst.msk [vmem:[#allocation2 + $0x38] sm:$0xff] %vm37, -1e+30
      %46 = vst.msk [vmem:[#allocation2 + $0x40] sm:$0xff] %vm37, -1e+30
      %47 = vst.msk [vmem:[#allocation2 + $0x48] sm:$0xff] %vm37, -1e+30
      %48 = vst.msk [vmem:[#allocation2 + $0x50] sm:$0xff] %vm37, -1e+30
      %49 = vst.msk [vmem:[#allocation2 + $0x58] sm:$0xff] %vm37, -1e+30
      %50 = vst.msk [vmem:[#allocation2 + $0x60] sm:$0xff] %vm37, -1e+30
      %51 = vst.msk [vmem:[#allocation2 + $0x68] sm:$0xff] %vm37, -1e+30
      %52 = vst.msk [vmem:[#allocation2 + $0x70] sm:$0xff] %vm37, -1e+30
      %53 = vst.msk [vmem:[#allocation2 + $0x78] sm:$0xff] %vm37, -1e+30
      %vm54 = vcmask 15368
      %55 = vst.msk [vmem:[#allocation2] sm:$0xff] %vm54, 0.0
      %56 = vst.msk [vmem:[#allocation2 + $0x8] sm:$0xff] %vm54, 0.0
      %57 = vst.msk [vmem:[#allocation2 + $0x10] sm:$0xff] %vm54, 0.0
      %58 = vst.msk [vmem:[#allocation2 + $0x18] sm:$0xff] %vm54, 0.0
      %59 = vst.msk [vmem:[#allocation2 + $0x20] sm:$0xff] %vm54, 0.0
      %60 = vst.msk [vmem:[#allocation2 + $0x28] sm:$0xff] %vm54, 0.0
      %61 = vst.msk [vmem:[#allocation2 + $0x30] sm:$0xff] %vm54, 0.0
      %62 = vst.msk [vmem:[#allocation2 + $0x38] sm:$0xff] %vm54, 0.0
      %63 = vst.msk [vmem:[#allocation2 + $0x40] sm:$0xff] %vm54, 0.0
      %64 = vst.msk [vmem:[#allocation2 + $0x48] sm:$0xff] %vm54, 0.0
      %65 = vst.msk [vmem:[#allocation2 + $0x50] sm:$0xff] %vm54, 0.0
      %66 = vst.msk [vmem:[#allocation2 + $0x58] sm:$0xff] %vm54, 0.0
      %67 = vst.msk [vmem:[#allocation2 + $0x60] sm:$0xff] %vm54, 0.0
      %68 = vst.msk [vmem:[#allocation2 + $0x68] sm:$0xff] %vm54, 0.0
      %69 = vst.msk [vmem:[#allocation2 + $0x70] sm:$0xff] %vm54, 0.0
      %70 = vst.msk [vmem:[#allocation2 + $0x78] sm:$0xff] %vm54, 0.0
      %vm71 = vcmask 23568
      %72 = vst.msk [vmem:[#allocation2] sm:$0xff] %vm71, -1e+30
      %73 = vst.msk [vmem:[#allocation2 + $0x8] sm:$0xff] %vm71, -1e+30
      %74 = vst.msk [vmem:[#allocation2 + $0x10] sm:$0xff] %vm71, -1e+30
      %75 = vst.msk [vmem:[#allocation2 + $0x18] sm:$0xff] %vm71, -1e+30
      %76 = vst.msk [vmem:[#allocation2 + $0x20] sm:$0xff] %vm71, -1e+30
      %77 = vst.msk [vmem:[#allocation2 + $0x28] sm:$0xff] %vm71, -1e+30
      %78 = vst.msk [vmem:[#allocation2 + $0x30] sm:$0xff] %vm71, -1e+30
      %79 = vst.msk [vmem:[#allocation2 + $0x38] sm:$0xff] %vm71, -1e+30
      %80 = vst.msk [vmem:[#allocation2 + $0x40] sm:$0xff] %vm71, -1e+30
      %81 = vst.msk [vmem:[#allocation2 + $0x48] sm:$0xff] %vm71, -1e+30
      %82 = vst.msk [vmem:[#allocation2 + $0x50] sm:$0xff] %vm71, -1e+30
      %83 = vst.msk [vmem:[#allocation2 + $0x58] sm:$0xff] %vm71, -1e+30
      %84 = vst.msk [vmem:[#allocation2 + $0x60] sm:$0xff] %vm71, -1e+30
      %85 = vst.msk [vmem:[#allocation2 + $0x68] sm:$0xff] %vm71, -1e+30
      %86 = vst.msk [vmem:[#allocation2 + $0x70] sm:$0xff] %vm71, -1e+30
      %87 = vst.msk [vmem:[#allocation2 + $0x78] sm:$0xff] %vm71, -1e+30
      %vm88 = vcmask 31768
      %89 = vst.msk [vmem:[#allocation2] sm:$0xff] %vm88, 0.0
      %90 = vst.msk [vmem:[#allocation2 + $0x8] sm:$0xff] %vm88, 0.0
      %91 = vst.msk [vmem:[#allocation2 + $0x10] sm:$0xff] %vm88, 0.0
      %92 = vst.msk [vmem:[#allocation2 + $0x18] sm:$0xff] %vm88, 0.0
      %93 = vst.msk [vmem:[#allocation2 + $0x20] sm:$0xff] %vm88, 0.0
      %94 = vst.msk [vmem:[#allocation2 + $0x28] sm:$0xff] %vm88, 0.0
      %95 = vst.msk [vmem:[#allocation2 + $0x30] sm:$0xff] %vm88, 0.0
      %96 = vst.msk [vmem:[#allocation2 + $0x38] sm:$0xff] %vm88, 0.0
      %97 = vst.msk [vmem:[#allocation2 + $0x40] sm:$0xff] %vm88, 0.0
      %98 = vst.msk [vmem:[#allocation2 + $0x48] sm:$0xff] %vm88, 0.0
      %99 = vst.msk [vmem:[#allocation2 + $0x50] sm:$0xff] %vm88, 0.0
      %100 = vst.msk [vmem:[#allocation2 + $0x58] sm:$0xff] %vm88, 0.0
      %101 = vst.msk [vmem:[#allocation2 + $0x60] sm:$0xff] %vm88, 0.0
      %102 = vst.msk [vmem:[#allocation2 + $0x68] sm:$0xff] %vm88, 0.0
      %103 = vst.msk [vmem:[#allocation2 + $0x70] sm:$0xff] %vm88, 0.0
      %104 = vst.msk [vmem:[#allocation2 + $0x78] sm:$0xff] %vm88, 0.0
    $region25: #{tpu_custom_call.1} parent=1 // pred_fallthru
      _
    %v105 = vld [vmem:[%s0] sm:$0xff]
    %v106 = vld [vmem:[%s0 + $0x8] sm:$0xff]
    %v107 = vld [vmem:[%s0 + $0x10] sm:$0xff]
    %v108 = vld [vmem:[%s0 + $0x18] sm:$0xff]
    %v109 = vld [vmem:[%s0 + $0x20] sm:$0xff]
    %v110 = vld [vmem:[%s0 + $0x28] sm:$0xff]
    %v111 = vld [vmem:[%s0 + $0x30] sm:$0xff]
    %v112 = vld [vmem:[%s0 + $0x38] sm:$0xff]
    %v113 = vld [vmem:[%s0 + $0x40] sm:$0xff]
    %v114 = vld [vmem:[%s0 + $0x48] sm:$0xff]
    %v115 = vld [vmem:[%s0 + $0x50] sm:$0xff]
    %v116 = vld [vmem:[%s0 + $0x58] sm:$0xff]
    %v117 = vld [vmem:[%s0 + $0x60] sm:$0xff]
    %v118 = vld [vmem:[%s0 + $0x68] sm:$0xff]
    %v119 = vld [vmem:[%s0 + $0x70] sm:$0xff]
    %v120 = vld [vmem:[%s0 + $0x78] sm:$0xff]
    %v121 = vld [vmem:[#allocation3] sm:$0xff]
    %v122 = vld [vmem:[#allocation3 + $0x8] sm:$0xff]
    %v123 = vld [vmem:[#allocation3 + $0x10] sm:$0xff]
    %v124 = vld [vmem:[#allocation3 + $0x18] sm:$0xff]
    %v125 = vld [vmem:[#allocation3 + $0x20] sm:$0xff]
    %v126 = vld [vmem:[#allocation3 + $0x28] sm:$0xff]
    %v127 = vld [vmem:[#allocation3 + $0x30] sm:$0xff]
    %v128 = vld [vmem:[#allocation3 + $0x38] sm:$0xff]
    %v129 = vld [vmem:[#allocation3 + $0x40] sm:$0xff]
    %v130 = vld [vmem:[#allocation3 + $0x48] sm:$0xff]
    %v131 = vld [vmem:[#allocation3 + $0x50] sm:$0xff]
    %v132 = vld [vmem:[#allocation3 + $0x58] sm:$0xff]
    %v133 = vld [vmem:[#allocation3 + $0x60] sm:$0xff]
    %v134 = vld [vmem:[#allocation3 + $0x68] sm:$0xff]
    %v135 = vld [vmem:[#allocation3 + $0x70] sm:$0xff]
    %v136 = vld [vmem:[#allocation3 + $0x78] sm:$0xff]
    %137 = vmatpush.xpose.msra.mxu0 %v136
    %138 = vmatpush.xpose.msra.mxu0 %v135
    %139 = vmatpush.xpose.msra.mxu0 %v134
    %140 = vmatpush.xpose.msra.mxu0 %v133
    %141 = vmatpush.xpose.msra.mxu0 %v132
    %142 = vmatpush.xpose.msra.mxu0 %v131
    %143 = vmatpush.xpose.msra.mxu0 %v130
    %144 = vmatpush.xpose.msra.mxu0 %v129
    %145 = vmatpush.xpose.msra.mxu0 %v128
    %146 = vmatpush.xpose.msra.mxu0 %v127
    %147 = vmatpush.xpose.msra.mxu0 %v126
    %148 = vmatpush.xpose.msra.mxu0 %v125
    %149 = vmatpush.xpose.msra.mxu0 %v124
    %150 = vmatpush.xpose.msra.mxu0 %v123
    %151 = vmatpush.xpose.msra.mxu0 %v122
    %152 = vmatpush.xpose.msra.mxu0 %v121
    %153 = vmatmul.f32.gmra.mxu0 %v105
    %v154 = vpop.f32.mrf.mxu0
    %v155 = vadd.f32 0.0, %v154
    %156 = vmatmul.f32.gmra.mxu0 %v106
    %v157 = vpop.f32.mrf.mxu0
    %v158 = vadd.f32 0.0, %v157
    %159 = vmatmul.f32.gmra.mxu0 %v107
    %v160 = vpop.f32.mrf.mxu0
    %v161 = vadd.f32 0.0, %v160
    %162 = vmatmul.f32.gmra.mxu0 %v108
    %v163 = vpop.f32.mrf.mxu0
    %v164 = vadd.f32 0.0, %v163
    %165 = vmatmul.f32.gmra.mxu0 %v109
    %v166 = vpop.f32.mrf.mxu0
    %v167 = vadd.f32 0.0, %v166
    %168 = vmatmul.f32.gmra.mxu0 %v110
    %v169 = vpop.f32.mrf.mxu0
    %v170 = vadd.f32 0.0, %v169
    %171 = vmatmul.f32.gmra.mxu0 %v111
    %v172 = vpop.f32.mrf.mxu0
    %v173 = vadd.f32 0.0, %v172
    %174 = vmatmul.f32.gmra.mxu0 %v112
    %v175 = vpop.f32.mrf.mxu0
    %v176 = vadd.f32 0.0, %v175
    %177 = vmatmul.f32.gmra.mxu0 %v113
    %v178 = vpop.f32.mrf.mxu0
    %v179 = vadd.f32 0.0, %v178
    %180 = vmatmul.f32.gmra.mxu0 %v114
    %v181 = vpop.f32.mrf.mxu0
    %v182 = vadd.f32 0.0, %v181
    %183 = vmatmul.f32.gmra.mxu0 %v115
    %v184 = vpop.f32.mrf.mxu0
    %v185 = vadd.f32 0.0, %v184
    %186 = vmatmul.f32.gmra.mxu0 %v116
    %v187 = vpop.f32.mrf.mxu0
    %v188 = vadd.f32 0.0, %v187
    %189 = vmatmul.f32.gmra.mxu0 %v117
    %v190 = vpop.f32.mrf.mxu0
    %v191 = vadd.f32 0.0, %v190
    %192 = vmatmul.f32.gmra.mxu0 %v118
    %v193 = vpop.f32.mrf.mxu0
    %v194 = vadd.f32 0.0, %v193
    %195 = vmatmul.f32.gmra.mxu0 %v119
    %v196 = vpop.f32.mrf.mxu0
    %v197 = vadd.f32 0.0, %v196
    %198 = vmatmul.f32.gmra.mxu0 %v120
    %v199 = vpop.f32.mrf.mxu0
    %v200 = vadd.f32 0.0, %v199
    %201 = vdwg.mxu0
    %s202 = smul.u32 0, 128
    %v203 = vlaneseq
    %v204 = vshrl.u32 %v203, 7
    %v205 = vadd.s32 %v204, 8
    %v206 = vadd.s32 %v204, 16
    %v207 = vadd.s32 %v204, 24
    %v208 = vadd.s32 %v204, 32
    %v209 = vadd.s32 %v204, 40
    %v210 = vadd.s32 %v204, 48
    %v211 = vadd.s32 %v204, 56
    %v212 = vadd.s32 %v204, 64
    %v213 = vadd.s32 %v204, 72
    %v214 = vadd.s32 %v204, 80
    %v215 = vadd.s32 %v204, 88
    %v216 = vadd.s32 %v204, 96
    %v217 = vadd.s32 %v204, 104
    %v218 = vadd.s32 %v204, 112
    %v219 = vadd.s32 %v204, 120
    %v220 = vstv %s202
    %v221 = vadd.s32 %v220, %v204
    %v222 = vadd.s32 %v220, %v205
    %v223 = vadd.s32 %v220, %v206
    %v224 = vadd.s32 %v220, %v207
    %v225 = vadd.s32 %v220, %v208
    %v226 = vadd.s32 %v220, %v209
    %v227 = vadd.s32 %v220, %v210
    %v228 = vadd.s32 %v220, %v211
    %v229 = vadd.s32 %v220, %v212
    %v230 = vadd.s32 %v220, %v213
    %v231 = vadd.s32 %v220, %v214
    %v232 = vadd.s32 %v220, %v215
    %v233 = vadd.s32 %v220, %v216
    %v234 = vadd.s32 %v220, %v217
    %v235 = vadd.s32 %v220, %v218
    %v236 = vadd.s32 %v220, %v219
    %s237 = smul.u32 0, 128
    %v238 = vlaneseq
    %v239 = vand.u32 %v238, 127
    %v240 = vstv %s237
    %v241 = vadd.s32 %v240, %v239
    %v242 = vld [vmem:[%s2] sm:$0xff]
    %v243 = vld [vmem:[%s2 + $0x8] sm:$0xff]
    %v244 = vld [vmem:[%s2 + $0x10] sm:$0xff]
    %v245 = vld [vmem:[%s2 + $0x18] sm:$0xff]
    %v246 = vld [vmem:[%s2 + $0x20] sm:$0xff]
    %v247 = vld [vmem:[%s2 + $0x28] sm:$0xff]
    %v248 = vld [vmem:[%s2 + $0x30] sm:$0xff]
    %v249 = vld [vmem:[%s2 + $0x38] sm:$0xff]
    %v250 = vld [vmem:[%s2 + $0x40] sm:$0xff]
    %v251 = vld [vmem:[%s2 + $0x48] sm:$0xff]
    %v252 = vld [vmem:[%s2 + $0x50] sm:$0xff]
    %v253 = vld [vmem:[%s2 + $0x58] sm:$0xff]
    %v254 = vld [vmem:[%s2 + $0x60] sm:$0xff]
    %v255 = vld [vmem:[%s2 + $0x68] sm:$0xff]
    %v256 = vld [vmem:[%s2 + $0x70] sm:$0xff]
    %v257 = vld [vmem:[%s2 + $0x78] sm:$0xff]
    %v258 = vld [vmem:[%s3] sm:$0x1]
    %259 = vset.pattern.permute.xlu0 0
    %260 = vperm.xlu0 %259, %v242
    %v261 = vpop.permute.xlu0 %260
    %262 = vset.pattern.permute.xlu0 0
    %263 = vperm.xlu0 %262, %v243
    %v264 = vpop.permute.xlu0 %263
    %265 = vset.pattern.permute.xlu0 0
    %266 = vperm.xlu0 %265, %v244
    %v267 = vpop.permute.xlu0 %266
    %268 = vset.pattern.permute.xlu0 0
    %269 = vperm.xlu0 %268, %v245
    %v270 = vpop.permute.xlu0 %269
    %271 = vset.pattern.permute.xlu0 0
    %272 = vperm.xlu0 %271, %v246
    %v273 = vpop.permute.xlu0 %272
    %274 = vset.pattern.permute.xlu0 0
    %275 = vperm.xlu0 %274, %v247
    %v276 = vpop.permute.xlu0 %275
    %277 = vset.pattern.permute.xlu0 0
    %278 = vperm.xlu0 %277, %v248
    %v279 = vpop.permute.xlu0 %278
    %280 = vset.pattern.permute.xlu0 0
    %281 = vperm.xlu0 %280, %v249
    %v282 = vpop.permute.xlu0 %281
    %283 = vset.pattern.permute.xlu0 0
    %284 = vperm.xlu0 %283, %v250
    %v285 = vpop.permute.xlu0 %284
    %286 = vset.pattern.permute.xlu0 0
    %287 = vperm.xlu0 %286, %v251
    %v288 = vpop.permute.xlu0 %287
    %289 = vset.pattern.permute.xlu0 0
    %290 = vperm.xlu0 %289, %v252
    %v291 = vpop.permute.xlu0 %290
    %292 = vset.pattern.permute.xlu0 0
    %293 = vperm.xlu0 %292, %v253
    %v294 = vpop.permute.xlu0 %293
    %295 = vset.pattern.permute.xlu0 0
    %296 = vperm.xlu0 %295, %v254
    %v297 = vpop.permute.xlu0 %296
    %298 = vset.pattern.permute.xlu0 0
    %299 = vperm.xlu0 %298, %v255
    %v300 = vpop.permute.xlu0 %299
    %301 = vset.pattern.permute.xlu0 0
    %302 = vperm.xlu0 %301, %v256
    %v303 = vpop.permute.xlu0 %302
    %304 = vset.pattern.permute.xlu0 0
    %305 = vperm.xlu0 %304, %v257
    %v306 = vpop.permute.xlu0 %305
    %v307 = vperm.slane %v258, 0
    %vm308 = vcmp.eq.s32.totalorder %v261, %v307
    %vm309 = vcmp.eq.s32.totalorder %v264, %v307
    %vm310 = vcmp.eq.s32.totalorder %v267, %v307
    %vm311 = vcmp.eq.s32.totalorder %v270, %v307
    %vm312 = vcmp.eq.s32.totalorder %v273, %v307
    %vm313 = vcmp.eq.s32.totalorder %v276, %v307
    %vm314 = vcmp.eq.s32.totalorder %v279, %v307
    %vm315 = vcmp.eq.s32.totalorder %v282, %v307
    %vm316 = vcmp.eq.s32.totalorder %v285, %v307
    %vm317 = vcmp.eq.s32.totalorder %v288, %v307
    %vm318 = vcmp.eq.s32.totalorder %v291, %v307
    %vm319 = vcmp.eq.s32.totalorder %v294, %v307
    %vm320 = vcmp.eq.s32.totalorder %v297, %v307
    %vm321 = vcmp.eq.s32.totalorder %v300, %v307
    %vm322 = vcmp.eq.s32.totalorder %v303, %v307
    %vm323 = vcmp.eq.s32.totalorder %v306, %v307
    %vm324 = vcmp.gt.s32.totalorder %v241, %v221
    %vm325 = vcmp.gt.s32.totalorder %v241, %v222
    %vm326 = vcmp.gt.s32.totalorder %v241, %v223
    %vm327 = vcmp.gt.s32.totalorder %v241, %v224
    %vm328 = vcmp.gt.s32.totalorder %v241, %v225
    %vm329 = vcmp.gt.s32.totalorder %v241, %v226
    %vm330 = vcmp.gt.s32.totalorder %v241, %v227
    %vm331 = vcmp.gt.s32.totalorder %v241, %v228
    %vm332 = vcmp.gt.s32.totalorder %v241, %v229
    %vm333 = vcmp.gt.s32.totalorder %v241, %v230
    %vm334 = vcmp.gt.s32.totalorder %v241, %v231
    %vm335 = vcmp.gt.s32.totalorder %v241, %v232
    %vm336 = vcmp.gt.s32.totalorder %v241, %v233
    %vm337 = vcmp.gt.s32.totalorder %v241, %v234
    %vm338 = vcmp.gt.s32.totalorder %v241, %v235
    %vm339 = vcmp.gt.s32.totalorder %v241, %v236
    %vm340 = vmand %vm308, %vm324
    %vm341 = vmand %vm309, %vm325
    %vm342 = vmand %vm310, %vm326
    %vm343 = vmand %vm311, %vm327
    %vm344 = vmand %vm312, %vm328
    %vm345 = vmand %vm313, %vm329
    %vm346 = vmand %vm314, %vm330
    %vm347 = vmand %vm315, %vm331
    %vm348 = vmand %vm316, %vm332
    %vm349 = vmand %vm317, %vm333
    %vm350 = vmand %vm318, %vm334
    %vm351 = vmand %vm319, %vm335
    %vm352 = vmand %vm320, %vm336
    %vm353 = vmand %vm321, %vm337
    %vm354 = vmand %vm322, %vm338
    %vm355 = vmand %vm323, %vm339
    %vm356 = vcmp.lt.s32.totalorder %v221, 32
    %vm357 = vcmp.lt.s32.totalorder %v222, 32
    %vm358 = vcmp.lt.s32.totalorder %v223, 32
    %vm359 = vcmp.lt.s32.totalorder %v224, 32
    %vm360 = vcmp.lt.s32.totalorder %v225, 32
    %vm361 = vcmp.lt.s32.totalorder %v226, 32
    %vm362 = vcmp.lt.s32.totalorder %v227, 32
    %vm363 = vcmp.lt.s32.totalorder %v228, 32
    %vm364 = vcmp.lt.s32.totalorder %v229, 32
    %vm365 = vcmp.lt.s32.totalorder %v230, 32
    %vm366 = vcmp.lt.s32.totalorder %v231, 32
    %vm367 = vcmp.lt.s32.totalorder %v232, 32
    %vm368 = vcmp.lt.s32.totalorder %v233, 32
    %vm369 = vcmp.lt.s32.totalorder %v234, 32
    %vm370 = vcmp.lt.s32.totalorder %v235, 32
    %vm371 = vcmp.lt.s32.totalorder %v236, 32
    %vm372 = vcmp.lt.s32.totalorder %v241, 32
    %vm373 = vmand %vm356, %vm372
    %vm374 = vmand %vm357, %vm372
    %vm375 = vmand %vm358, %vm372
    %vm376 = vmand %vm359, %vm372
    %vm377 = vmand %vm360, %vm372
    %vm378 = vmand %vm361, %vm372
    %vm379 = vmand %vm362, %vm372
    %vm380 = vmand %vm363, %vm372
    %vm381 = vmand %vm364, %vm372
    %vm382 = vmand %vm365, %vm372
    %vm383 = vmand %vm366, %vm372
    %vm384 = vmand %vm367, %vm372
    %vm385 = vmand %vm368, %vm372
    %vm386 = vmand %vm369, %vm372
    %vm387 = vmand %vm370, %vm372
    %vm388 = vmand %vm371, %vm372
    %vm389 = vmand %vm340, %vm373
    %vm390 = vmand %vm341, %vm374
    %vm391 = vmand %vm342, %vm375
    %vm392 = vmand %vm343, %vm376
    %vm393 = vmand %vm344, %vm377
    %vm394 = vmand %vm345, %vm378
    %vm395 = vmand %vm346, %vm379
    %vm396 = vmand %vm347, %vm380
    %vm397 = vmand %vm348, %vm381
    %vm398 = vmand %vm349, %vm382
    %vm399 = vmand %vm350, %vm383
    %vm400 = vmand %vm351, %vm384
    %vm401 = vmand %vm352, %vm385
    %vm402 = vmand %vm353, %vm386
    %vm403 = vmand %vm354, %vm387
    %vm404 = vmand %vm355, %vm388
    %vm405 = vmxor %vm340, 1
    %vm406 = vmxor %vm341, 1
    %vm407 = vmxor %vm342, 1
    %vm408 = vmxor %vm343, 1
    %vm409 = vmxor %vm344, 1
    %vm410 = vmxor %vm345, 1
    %vm411 = vmxor %vm346, 1
    %vm412 = vmxor %vm347, 1
    %vm413 = vmxor %vm348, 1
    %vm414 = vmxor %vm349, 1
    %vm415 = vmxor %vm350, 1
    %vm416 = vmxor %vm351, 1
    %vm417 = vmxor %vm352, 1
    %vm418 = vmxor %vm353, 1
    %vm419 = vmxor %vm354, 1
    %vm420 = vmxor %vm355, 1
    %vm421 = vmand %vm405, %vm373
    %vm422 = vmand %vm406, %vm374
    %vm423 = vmand %vm407, %vm375
    %vm424 = vmand %vm408, %vm376
    %vm425 = vmand %vm409, %vm377
    %vm426 = vmand %vm410, %vm378
    %vm427 = vmand %vm411, %vm379
    %vm428 = vmand %vm412, %vm380
    %vm429 = vmand %vm413, %vm381
    %vm430 = vmand %vm414, %vm382
    %vm431 = vmand %vm415, %vm383
    %vm432 = vmand %vm416, %vm384
    %vm433 = vmand %vm417, %vm385
    %vm434 = vmand %vm418, %vm386
    %vm435 = vmand %vm419, %vm387
    %vm436 = vmand %vm420, %vm388
    %v437 = vsub.f32 1.25, %v155
    %v438 = vsub.f32 1.25, %v158
    %v439 = vsub.f32 1.25, %v161
    %v440 = vsub.f32 1.25, %v164
    %v441 = vsub.f32 1.25, %v167
    %v442 = vsub.f32 1.25, %v170
    %v443 = vsub.f32 1.25, %v173
    %v444 = vsub.f32 1.25, %v176
    %v445 = vsub.f32 1.25, %v179
    %v446 = vsub.f32 1.25, %v182
    %v447 = vsub.f32 1.25, %v185
    %v448 = vsub.f32 1.25, %v188
    %v449 = vsub.f32 1.25, %v191
    %v450 = vsub.f32 1.25, %v194
    %v451 = vsub.f32 1.25, %v197
    %v452 = vsub.f32 1.25, %v200
    %v453 = vadd.f32 %v155, 0.25
    %v454 = vadd.f32 %v158, 0.25
    %v455 = vadd.f32 %v161, 0.25
    %v456 = vadd.f32 %v164, 0.25
    %v457 = vadd.f32 %v167, 0.25
    %v458 = vadd.f32 %v170, 0.25
    %v459 = vadd.f32 %v173, 0.25
    %v460 = vadd.f32 %v176, 0.25
    %v461 = vadd.f32 %v179, 0.25
    %v462 = vadd.f32 %v182, 0.25
    %v463 = vadd.f32 %v185, 0.25
    %v464 = vadd.f32 %v188, 0.25
    %v465 = vadd.f32 %v191, 0.25
    %v466 = vadd.f32 %v194, 0.25
    %v467 = vadd.f32 %v197, 0.25
    %v468 = vadd.f32 %v200, 0.25
    %v469 = vsel %vm389, %v437, %v453
    %v470 = vsel %vm390, %v438, %v454
    %v471 = vsel %vm391, %v439, %v455
    %v472 = vsel %vm392, %v440, %v456
    %v473 = vsel %vm393, %v441, %v457
    %v474 = vsel %vm394, %v442, %v458
    %v475 = vsel %vm395, %v443, %v459
    %v476 = vsel %vm396, %v444, %v460
    %v477 = vsel %vm397, %v445, %v461
    %v478 = vsel %vm398, %v446, %v462
    %v479 = vsel %vm399, %v447, %v463
    %v480 = vsel %vm400, %v448, %v464
    %v481 = vsel %vm401, %v449, %v465
    %v482 = vsel %vm402, %v450, %v466
    %v483 = vsel %vm403, %v451, %v467
    %v484 = vsel %vm404, %v452, %v468
    %v485 = vmax.f32 %v469, 0.0
    %v486 = vmax.f32 %v470, 0.0
    %v487 = vmax.f32 %v471, 0.0
    %v488 = vmax.f32 %v472, 0.0
    %v489 = vmax.f32 %v473, 0.0
    %v490 = vmax.f32 %v474, 0.0
    %v491 = vmax.f32 %v475, 0.0
    %v492 = vmax.f32 %v476, 0.0
    %v493 = vmax.f32 %v477, 0.0
    %v494 = vmax.f32 %v478, 0.0
    %v495 = vmax.f32 %v479, 0.0
    %v496 = vmax.f32 %v480, 0.0
    %v497 = vmax.f32 %v481, 0.0
    %v498 = vmax.f32 %v482, 0.0
    %v499 = vmax.f32 %v483, 0.0
    %v500 = vmax.f32 %v484, 0.0
    %v501 = vsel %vm389, 0.75, 0.25
    %v502 = vsel %vm390, 0.75, 0.25
    %v503 = vsel %vm391, 0.75, 0.25
    %v504 = vsel %vm392, 0.75, 0.25
    %v505 = vsel %vm393, 0.75, 0.25
    %v506 = vsel %vm394, 0.75, 0.25
    %v507 = vsel %vm395, 0.75, 0.25
    %v508 = vsel %vm396, 0.75, 0.25
    %v509 = vsel %vm397, 0.75, 0.25
    %v510 = vsel %vm398, 0.75, 0.25
    %v511 = vsel %vm399, 0.75, 0.25
    %v512 = vsel %vm400, 0.75, 0.25
    %v513 = vsel %vm401, 0.75, 0.25
    %v514 = vsel %vm402, 0.75, 0.25
    %v515 = vsel %vm403, 0.75, 0.25
    %v516 = vsel %vm404, 0.75, 0.25
    %v517 = vsel %vm389, -32.0, 32.0
    %v518 = vsel %vm390, -32.0, 32.0
    %v519 = vsel %vm391, -32.0, 32.0
    %v520 = vsel %vm392, -32.0, 32.0
    %v521 = vsel %vm393, -32.0, 32.0
    %v522 = vsel %vm394, -32.0, 32.0
    %v523 = vsel %vm395, -32.0, 32.0
    %v524 = vsel %vm396, -32.0, 32.0
    %v525 = vsel %vm397, -32.0, 32.0
    %v526 = vsel %vm398, -32.0, 32.0
    %v527 = vsel %vm399, -32.0, 32.0
    %v528 = vsel %vm400, -32.0, 32.0
    %v529 = vsel %vm401, -32.0, 32.0
    %v530 = vsel %vm402, -32.0, 32.0
    %v531 = vsel %vm403, -32.0, 32.0
    %v532 = vsel %vm404, -32.0, 32.0
    %v533 = vmul.f32 %v517, %v485
    %v534 = vmul.f32 %v518, %v486
    %v535 = vmul.f32 %v519, %v487
    %v536 = vmul.f32 %v520, %v488
    %v537 = vmul.f32 %v521, %v489
    %v538 = vmul.f32 %v522, %v490
    %v539 = vmul.f32 %v523, %v491
    %v540 = vmul.f32 %v524, %v492
    %v541 = vmul.f32 %v525, %v493
    %v542 = vmul.f32 %v526, %v494
    %v543 = vmul.f32 %v527, %v495
    %v544 = vmul.f32 %v528, %v496
    %v545 = vmul.f32 %v529, %v497
    %v546 = vmul.f32 %v530, %v498
    %v547 = vmul.f32 %v531, %v499
    %v548 = vmul.f32 %v532, %v500
    %v549 = vsub.f32 %v155, %v501
    %v550 = vsub.f32 %v158, %v502
    %v551 = vsub.f32 %v161, %v503
    %v552 = vsub.f32 %v164, %v504
    %v553 = vsub.f32 %v167, %v505
    %v554 = vsub.f32 %v170, %v506
    %v555 = vsub.f32 %v173, %v507
    %v556 = vsub.f32 %v176, %v508
    %v557 = vsub.f32 %v179, %v509
    %v558 = vsub.f32 %v182, %v510
    %v559 = vsub.f32 %v185, %v511
    %v560 = vsub.f32 %v188, %v512
    %v561 = vsub.f32 %v191, %v513
    %v562 = vsub.f32 %v194, %v514
    %v563 = vsub.f32 %v197, %v515
    %v564 = vsub.f32 %v200, %v516
    %v565 = vmul.f32 %v533, %v549
    %v566 = vmul.f32 %v534, %v550
    %v567 = vmul.f32 %v535, %v551
    %v568 = vmul.f32 %v536, %v552
    %v569 = vmul.f32 %v537, %v553
    %v570 = vmul.f32 %v538, %v554
    %v571 = vmul.f32 %v539, %v555
    %v572 = vmul.f32 %v540, %v556
    %v573 = vmul.f32 %v541, %v557
    %v574 = vmul.f32 %v542, %v558
    %v575 = vmul.f32 %v543, %v559
    %v576 = vmul.f32 %v544, %v560
    %v577 = vmul.f32 %v545, %v561
    %v578 = vmul.f32 %v546, %v562
    %v579 = vmul.f32 %v547, %v563
    %v580 = vmul.f32 %v548, %v564
    %v581 = vld [vmem:[#allocation2] sm:$0xff]
    %v582 = vld [vmem:[#allocation2 + $0x8] sm:$0xff]
    %v583 = vld [vmem:[#allocation2 + $0x10] sm:$0xff]
    %v584 = vld [vmem:[#allocation2 + $0x18] sm:$0xff]
    %v585 = vld [vmem:[#allocation2 + $0x20] sm:$0xff]
    %v586 = vld [vmem:[#allocation2 + $0x28] sm:$0xff]
    %v587 = vld [vmem:[#allocation2 + $0x30] sm:$0xff]
    %v588 = vld [vmem:[#allocation2 + $0x38] sm:$0xff]
    %v589 = vld [vmem:[#allocation2 + $0x40] sm:$0xff]
    %v590 = vld [vmem:[#allocation2 + $0x48] sm:$0xff]
    %v591 = vld [vmem:[#allocation2 + $0x50] sm:$0xff]
    %v592 = vld [vmem:[#allocation2 + $0x58] sm:$0xff]
    %v593 = vld [vmem:[#allocation2 + $0x60] sm:$0xff]
    %v594 = vld [vmem:[#allocation2 + $0x68] sm:$0xff]
    %v595 = vld [vmem:[#allocation2 + $0x70] sm:$0xff]
    %v596 = vld [vmem:[#allocation2 + $0x78] sm:$0xff]
    %v597 = vsel %vm389, %v565, -1e+30
    %v598 = vsel %vm390, %v566, -1e+30
    %v599 = vsel %vm391, %v567, -1e+30
    %v600 = vsel %vm392, %v568, -1e+30
    %v601 = vsel %vm393, %v569, -1e+30
    %v602 = vsel %vm394, %v570, -1e+30
    %v603 = vsel %vm395, %v571, -1e+30
    %v604 = vsel %vm396, %v572, -1e+30
    %v605 = vsel %vm397, %v573, -1e+30
    %v606 = vsel %vm398, %v574, -1e+30
    %v607 = vsel %vm399, %v575, -1e+30
    %v608 = vsel %vm400, %v576, -1e+30
    %v609 = vsel %vm401, %v577, -1e+30
    %v610 = vsel %vm402, %v578, -1e+30
    %v611 = vsel %vm403, %v579, -1e+30
    %v612 = vsel %vm404, %v580, -1e+30
    %v613 = vsel %vm421, %v565, -1e+30
    %v614 = vsel %vm422, %v566, -1e+30
    %v615 = vsel %vm423, %v567, -1e+30
    %v616 = vsel %vm424, %v568, -1e+30
    %v617 = vsel %vm425, %v569, -1e+30
    %v618 = vsel %vm426, %v570, -1e+30
    %v619 = vsel %vm427, %v571, -1e+30
    %v620 = vsel %vm428, %v572, -1e+30
    %v621 = vsel %vm429, %v573, -1e+30
    %v622 = vsel %vm430, %v574, -1e+30
    %v623 = vsel %vm431, %v575, -1e+30
    %v624 = vsel %vm432, %v576, -1e+30
    %v625 = vsel %vm433, %v577, -1e+30
    %v626 = vsel %vm434, %v578, -1e+30
    %v627 = vsel %vm435, %v579, -1e+30
    %v628 = vsel %vm436, %v580, -1e+30
    %629 = vmax.xlane.f32.xlu0 %v597
    %v630 = vpop.xlane.xlu0 %629
    %631 = vmax.xlane.f32.xlu0 %v598
    %v632 = vpop.xlane.xlu0 %631
    %633 = vmax.xlane.f32.xlu0 %v599
    %v634 = vpop.xlane.xlu0 %633
    %635 = vmax.xlane.f32.xlu0 %v600
    %v636 = vpop.xlane.xlu0 %635
    %637 = vmax.xlane.f32.xlu0 %v601
    %v638 = vpop.xlane.xlu0 %637
    %639 = vmax.xlane.f32.xlu0 %v602
    %v640 = vpop.xlane.xlu0 %639
    %641 = vmax.xlane.f32.xlu0 %v603
    %v642 = vpop.xlane.xlu0 %641
    %643 = vmax.xlane.f32.xlu0 %v604
    %v644 = vpop.xlane.xlu0 %643
    %645 = vmax.xlane.f32.xlu0 %v605
    %v646 = vpop.xlane.xlu0 %645
    %647 = vmax.xlane.f32.xlu0 %v606
    %v648 = vpop.xlane.xlu0 %647
    %649 = vmax.xlane.f32.xlu0 %v607
    %v650 = vpop.xlane.xlu0 %649
    %651 = vmax.xlane.f32.xlu0 %v608
    %v652 = vpop.xlane.xlu0 %651
    %653 = vmax.xlane.f32.xlu0 %v609
    %v654 = vpop.xlane.xlu0 %653
    %655 = vmax.xlane.f32.xlu0 %v610
    %v656 = vpop.xlane.xlu0 %655
    %657 = vmax.xlane.f32.xlu0 %v611
    %v658 = vpop.xlane.xlu0 %657
    %659 = vmax.xlane.f32.xlu0 %v612
    %v660 = vpop.xlane.xlu0 %659
    %v661 = vmax.f32 %v581, %v630
    %v662 = vmax.f32 %v582, %v632
    %v663 = vmax.f32 %v583, %v634
    %v664 = vmax.f32 %v584, %v636
    %v665 = vmax.f32 %v585, %v638
    %v666 = vmax.f32 %v586, %v640
    %v667 = vmax.f32 %v587, %v642
    %v668 = vmax.f32 %v588, %v644
    %v669 = vmax.f32 %v589, %v646
    %v670 = vmax.f32 %v590, %v648
    %v671 = vmax.f32 %v591, %v650
    %v672 = vmax.f32 %v592, %v652
    %v673 = vmax.f32 %v593, %v654
    %v674 = vmax.f32 %v594, %v656
    %v675 = vmax.f32 %v595, %v658
    %v676 = vmax.f32 %v596, %v660
    %677 = vmax.xlane.f32.xlu0 %v613
    %v678 = vpop.xlane.xlu0 %677
    %679 = vmax.xlane.f32.xlu0 %v614
    %v680 = vpop.xlane.xlu0 %679
    %681 = vmax.xlane.f32.xlu0 %v615
    %v682 = vpop.xlane.xlu0 %681
    %683 = vmax.xlane.f32.xlu0 %v616
    %v684 = vpop.xlane.xlu0 %683
    %685 = vmax.xlane.f32.xlu0 %v617
    %v686 = vpop.xlane.xlu0 %685
    %687 = vmax.xlane.f32.xlu0 %v618
    %v688 = vpop.xlane.xlu0 %687
    %689 = vmax.xlane.f32.xlu0 %v619
    %v690 = vpop.xlane.xlu0 %689
    %691 = vmax.xlane.f32.xlu0 %v620
    %v692 = vpop.xlane.xlu0 %691
    %693 = vmax.xlane.f32.xlu0 %v621
    %v694 = vpop.xlane.xlu0 %693
    %695 = vmax.xlane.f32.xlu0 %v622
    %v696 = vpop.xlane.xlu0 %695
    %697 = vmax.xlane.f32.xlu0 %v623
    %v698 = vpop.xlane.xlu0 %697
    %699 = vmax.xlane.f32.xlu0 %v624
    %v700 = vpop.xlane.xlu0 %699
    %701 = vmax.xlane.f32.xlu0 %v625
    %v702 = vpop.xlane.xlu0 %701
    %703 = vmax.xlane.f32.xlu0 %v626
    %v704 = vpop.xlane.xlu0 %703
    %705 = vmax.xlane.f32.xlu0 %v627
    %v706 = vpop.xlane.xlu0 %705
    %707 = vmax.xlane.f32.xlu0 %v628
    %v708 = vpop.xlane.xlu0 %707
    %v709 = vmax.f32 %v581, %v678
    %v710 = vmax.f32 %v582, %v680
    %v711 = vmax.f32 %v583, %v682
    %v712 = vmax.f32 %v584, %v684
    %v713 = vmax.f32 %v585, %v686
    %v714 = vmax.f32 %v586, %v688
    %v715 = vmax.f32 %v587, %v690
    %v716 = vmax.f32 %v588, %v692
    %v717 = vmax.f32 %v589, %v694
    %v718 = vmax.f32 %v590, %v696
    %v719 = vmax.f32 %v591, %v698
    %v720 = vmax.f32 %v592, %v700
    %v721 = vmax.f32 %v593, %v702
    %v722 = vmax.f32 %v594, %v704
    %v723 = vmax.f32 %v595, %v706
    %v724 = vmax.f32 %v596, %v708
    %726 = vset.pattern.permute.xlu0 0
    %727 = vperm.xlu0 %726, %v661
    %v728 = vpop.permute.xlu0 %727
    %731 = vset.pattern.permute.xlu0 0
    %732 = vperm.xlu0 %731, %v662
    %v733 = vpop.permute.xlu0 %732
    %736 = vset.pattern.permute.xlu0 0
    %737 = vperm.xlu0 %736, %v663
    %v738 = vpop.permute.xlu0 %737
    %741 = vset.pattern.permute.xlu0 0
    %742 = vperm.xlu0 %741, %v664
    %v743 = vpop.permute.xlu0 %742
    %746 = vset.pattern.permute.xlu0 0
    %747 = vperm.xlu0 %746, %v665
    %v748 = vpop.permute.xlu0 %747
    %751 = vset.pattern.permute.xlu0 0
    %752 = vperm.xlu0 %751, %v666
    %v753 = vpop.permute.xlu0 %752
    %756 = vset.pattern.permute.xlu0 0
    %757 = vperm.xlu0 %756, %v667
    %v758 = vpop.permute.xlu0 %757
    %761 = vset.pattern.permute.xlu0 0
    %762 = vperm.xlu0 %761, %v668
    %v763 = vpop.permute.xlu0 %762
    %766 = vset.pattern.permute.xlu0 0
    %767 = vperm.xlu0 %766, %v669
    %v768 = vpop.permute.xlu0 %767
    %771 = vset.pattern.permute.xlu0 0
    %772 = vperm.xlu0 %771, %v670
    %v773 = vpop.permute.xlu0 %772
    %776 = vset.pattern.permute.xlu0 0
    %777 = vperm.xlu0 %776, %v671
    %v778 = vpop.permute.xlu0 %777
    %781 = vset.pattern.permute.xlu0 0
    %782 = vperm.xlu0 %781, %v672
    %v783 = vpop.permute.xlu0 %782
    %786 = vset.pattern.permute.xlu0 0
    %787 = vperm.xlu0 %786, %v673
    %v788 = vpop.permute.xlu0 %787
    %791 = vset.pattern.permute.xlu0 0
    %792 = vperm.xlu0 %791, %v674
    %v793 = vpop.permute.xlu0 %792
    %796 = vset.pattern.permute.xlu0 0
    %797 = vperm.xlu0 %796, %v675
    %v798 = vpop.permute.xlu0 %797
    %801 = vset.pattern.permute.xlu0 0
    %802 = vperm.xlu0 %801, %v676
    %v803 = vpop.permute.xlu0 %802
    %806 = vset.pattern.permute.xlu0 2
    %807 = vperm.xlu0 %806, %v709
    %v808 = vpop.permute.xlu0 %807
    %811 = vset.pattern.permute.xlu0 2
    %812 = vperm.xlu0 %811, %v710
    %v813 = vpop.permute.xlu0 %812
    %816 = vset.pattern.permute.xlu0 2
    %817 = vperm.xlu0 %816, %v711
    %v818 = vpop.permute.xlu0 %817
    %821 = vset.pattern.permute.xlu0 2
    %822 = vperm.xlu0 %821, %v712
    %v823 = vpop.permute.xlu0 %822
    %826 = vset.pattern.permute.xlu0 2
    %827 = vperm.xlu0 %826, %v713
    %v828 = vpop.permute.xlu0 %827
    %831 = vset.pattern.permute.xlu0 2
    %832 = vperm.xlu0 %831, %v714
    %v833 = vpop.permute.xlu0 %832
    %836 = vset.pattern.permute.xlu0 2
    %837 = vperm.xlu0 %836, %v715
    %v838 = vpop.permute.xlu0 %837
    %841 = vset.pattern.permute.xlu0 2
    %842 = vperm.xlu0 %841, %v716
    %v843 = vpop.permute.xlu0 %842
    %846 = vset.pattern.permute.xlu0 2
    %847 = vperm.xlu0 %846, %v717
    %v848 = vpop.permute.xlu0 %847
    %851 = vset.pattern.permute.xlu0 2
    %852 = vperm.xlu0 %851, %v718
    %v853 = vpop.permute.xlu0 %852
    %856 = vset.pattern.permute.xlu0 2
    %857 = vperm.xlu0 %856, %v719
    %v858 = vpop.permute.xlu0 %857
    %861 = vset.pattern.permute.xlu0 2
    %862 = vperm.xlu0 %861, %v720
    %v863 = vpop.permute.xlu0 %862
    %866 = vset.pattern.permute.xlu0 2
    %867 = vperm.xlu0 %866, %v721
    %v868 = vpop.permute.xlu0 %867
    %871 = vset.pattern.permute.xlu0 2
    %872 = vperm.xlu0 %871, %v722
    %v873 = vpop.permute.xlu0 %872
    %876 = vset.pattern.permute.xlu0 2
    %877 = vperm.xlu0 %876, %v723
    %v878 = vpop.permute.xlu0 %877
    %881 = vset.pattern.permute.xlu0 2
    %882 = vperm.xlu0 %881, %v724
    %v883 = vpop.permute.xlu0 %882
    %v885 = vsel %vm389, %v728, %v808
    %v886 = vsel %vm390, %v733, %v813
    %v887 = vsel %vm391, %v738, %v818
    %v888 = vsel %vm392, %v743, %v823
    %v889 = vsel %vm393, %v748, %v828
    %v890 = vsel %vm394, %v753, %v833
    %v891 = vsel %vm395, %v758, %v838
    %v892 = vsel %vm396, %v763, %v843
    %v893 = vsel %vm397, %v768, %v848
    %v894 = vsel %vm398, %v773, %v853
    %v895 = vsel %vm399, %v778, %v858
    %v896 = vsel %vm400, %v783, %v863
    %v897 = vsel %vm401, %v788, %v868
    %v898 = vsel %vm402, %v793, %v873
    %v899 = vsel %vm403, %v798, %v878
    %v900 = vsel %vm404, %v803, %v883
    %v901 = vsel %vm373, %v565, -1e+30
    %v902 = vsel %vm374, %v566, -1e+30
    %v903 = vsel %vm375, %v567, -1e+30
    %v904 = vsel %vm376, %v568, -1e+30
    %v905 = vsel %vm377, %v569, -1e+30
    %v906 = vsel %vm378, %v570, -1e+30
    %v907 = vsel %vm379, %v571, -1e+30
    %v908 = vsel %vm380, %v572, -1e+30
    %v909 = vsel %vm381, %v573, -1e+30
    %v910 = vsel %vm382, %v574, -1e+30
    %v911 = vsel %vm383, %v575, -1e+30
    %v912 = vsel %vm384, %v576, -1e+30
    %v913 = vsel %vm385, %v577, -1e+30
    %v914 = vsel %vm386, %v578, -1e+30
    %v915 = vsel %vm387, %v579, -1e+30
    %v916 = vsel %vm388, %v580, -1e+30
    %v917 = vsub.f32 %v901, %v885
    %v918 = vsub.f32 %v902, %v886
    %v919 = vsub.f32 %v903, %v887
    %v920 = vsub.f32 %v904, %v888
    %v921 = vsub.f32 %v905, %v889
    %v922 = vsub.f32 %v906, %v890
    %v923 = vsub.f32 %v907, %v891
    %v924 = vsub.f32 %v908, %v892
    %v925 = vsub.f32 %v909, %v893
    %v926 = vsub.f32 %v910, %v894
    %v927 = vsub.f32 %v911, %v895
    %v928 = vsub.f32 %v912, %v896
    %v929 = vsub.f32 %v913, %v897
    %v930 = vsub.f32 %v914, %v898
    %v931 = vsub.f32 %v915, %v899
    %v932 = vsub.f32 %v916, %v900
    %v933 = vmul.f32 %v917, 1.442695
    %v934 = vpow.pop %v933
    %v935 = vmul.f32 %v918, 1.442695
    %v936 = vpow.pop %v935
    %v937 = vmul.f32 %v919, 1.442695
    %v938 = vpow.pop %v937
    %v939 = vmul.f32 %v920, 1.442695
    %v940 = vpow.pop %v939
    %v941 = vmul.f32 %v921, 1.442695
    %v942 = vpow.pop %v941
    %v943 = vmul.f32 %v922, 1.442695
    %v944 = vpow.pop %v943
    %v945 = vmul.f32 %v923, 1.442695
    %v946 = vpow.pop %v945
    %v947 = vmul.f32 %v924, 1.442695
    %v948 = vpow.pop %v947
    %v949 = vmul.f32 %v925, 1.442695
    %v950 = vpow.pop %v949
    %v951 = vmul.f32 %v926, 1.442695
    %v952 = vpow.pop %v951
    %v953 = vmul.f32 %v927, 1.442695
    %v954 = vpow.pop %v953
    %v955 = vmul.f32 %v928, 1.442695
    %v956 = vpow.pop %v955
    %v957 = vmul.f32 %v929, 1.442695
    %v958 = vpow.pop %v957
    %v959 = vmul.f32 %v930, 1.442695
    %v960 = vpow.pop %v959
    %v961 = vmul.f32 %v931, 1.442695
    %v962 = vpow.pop %v961
    %v963 = vmul.f32 %v932, 1.442695
    %v964 = vpow.pop %v963
    %v965 = vsel %vm389, %v934, 0.0
    %v966 = vsel %vm390, %v936, 0.0
    %v967 = vsel %vm391, %v938, 0.0
    %v968 = vsel %vm392, %v940, 0.0
    %v969 = vsel %vm393, %v942, 0.0
    %v970 = vsel %vm394, %v944, 0.0
    %v971 = vsel %vm395, %v946, 0.0
    %v972 = vsel %vm396, %v948, 0.0
    %v973 = vsel %vm397, %v950, 0.0
    %v974 = vsel %vm398, %v952, 0.0
    %v975 = vsel %vm399, %v954, 0.0
    %v976 = vsel %vm400, %v956, 0.0
    %v977 = vsel %vm401, %v958, 0.0
    %v978 = vsel %vm402, %v960, 0.0
    %v979 = vsel %vm403, %v962, 0.0
    %v980 = vsel %vm404, %v964, 0.0
    %v981 = vsel %vm421, %v934, 0.0
    %v982 = vsel %vm422, %v936, 0.0
    %v983 = vsel %vm423, %v938, 0.0
    %v984 = vsel %vm424, %v940, 0.0
    %v985 = vsel %vm425, %v942, 0.0
    %v986 = vsel %vm426, %v944, 0.0
    %v987 = vsel %vm427, %v946, 0.0
    %v988 = vsel %vm428, %v948, 0.0
    %v989 = vsel %vm429, %v950, 0.0
    %v990 = vsel %vm430, %v952, 0.0
    %v991 = vsel %vm431, %v954, 0.0
    %v992 = vsel %vm432, %v956, 0.0
    %v993 = vsel %vm433, %v958, 0.0
    %v994 = vsel %vm434, %v960, 0.0
    %v995 = vsel %vm435, %v962, 0.0
    %v996 = vsel %vm436, %v964, 0.0
    %vm997 = vcmask 7168
    %998 = vst.msk [vmem:[#allocation2] sm:$0xff] %vm997, %v661
    %999 = vst.msk [vmem:[#allocation2 + $0x8] sm:$0xff] %vm997, %v662
    %1000 = vst.msk [vmem:[#allocation2 + $0x10] sm:$0xff] %vm997, %v663
    %1001 = vst.msk [vmem:[#allocation2 + $0x18] sm:$0xff] %vm997, %v664
    %1002 = vst.msk [vmem:[#allocation2 + $0x20] sm:$0xff] %vm997, %v665
    %1003 = vst.msk [vmem:[#allocation2 + $0x28] sm:$0xff] %vm997, %v666
    %1004 = vst.msk [vmem:[#allocation2 + $0x30] sm:$0xff] %vm997, %v667
    %1005 = vst.msk [vmem:[#allocation2 + $0x38] sm:$0xff] %vm997, %v668
    %1006 = vst.msk [vmem:[#allocation2 + $0x40] sm:$0xff] %vm997, %v669
    %1007 = vst.msk [vmem:[#allocation2 + $0x48] sm:$0xff] %vm997, %v670
    %1008 = vst.msk [vmem:[#allocation2 + $0x50] sm:$0xff] %vm997, %v671
    %1009 = vst.msk [vmem:[#allocation2 + $0x58] sm:$0xff] %vm997, %v672
    %1010 = vst.msk [vmem:[#allocation2 + $0x60] sm:$0xff] %vm997, %v673
    %1011 = vst.msk [vmem:[#allocation2 + $0x68] sm:$0xff] %vm997, %v674
    %1012 = vst.msk [vmem:[#allocation2 + $0x70] sm:$0xff] %vm997, %v675
    %1013 = vst.msk [vmem:[#allocation2 + $0x78] sm:$0xff] %vm997, %v676
    %v1014 = vsub.f32 %v581, %v661
    %v1015 = vsub.f32 %v582, %v662
    %v1016 = vsub.f32 %v583, %v663
    %v1017 = vsub.f32 %v584, %v664
    %v1018 = vsub.f32 %v585, %v665
    %v1019 = vsub.f32 %v586, %v666
    %v1020 = vsub.f32 %v587, %v667
    %v1021 = vsub.f32 %v588, %v668
    %v1022 = vsub.f32 %v589, %v669
    %v1023 = vsub.f32 %v590, %v670
    %v1024 = vsub.f32 %v591, %v671
    %v1025 = vsub.f32 %v592, %v672
    %v1026 = vsub.f32 %v593, %v673
    %v1027 = vsub.f32 %v594, %v674
    %v1028 = vsub.f32 %v595, %v675
    %v1029 = vsub.f32 %v596, %v676
    %v1030 = vmul.f32 %v1014, 1.442695
    %v1031 = vpow.pop %v1030
    %v1032 = vmul.f32 %v1015, 1.442695
    %v1033 = vpow.pop %v1032
    %v1034 = vmul.f32 %v1016, 1.442695
    %v1035 = vpow.pop %v1034
    %v1036 = vmul.f32 %v1017, 1.442695
    %v1037 = vpow.pop %v1036
    %v1038 = vmul.f32 %v1018, 1.442695
    %v1039 = vpow.pop %v1038
    %v1040 = vmul.f32 %v1019, 1.442695
    %v1041 = vpow.pop %v1040
    %v1042 = vmul.f32 %v1020, 1.442695
    %v1043 = vpow.pop %v1042
    %v1044 = vmul.f32 %v1021, 1.442695
    %v1045 = vpow.pop %v1044
    %v1046 = vmul.f32 %v1022, 1.442695
    %v1047 = vpow.pop %v1046
    %v1048 = vmul.f32 %v1023, 1.442695
    %v1049 = vpow.pop %v1048
    %v1050 = vmul.f32 %v1024, 1.442695
    %v1051 = vpow.pop %v1050
    %v1052 = vmul.f32 %v1025, 1.442695
    %v1053 = vpow.pop %v1052
    %v1054 = vmul.f32 %v1026, 1.442695
    %v1055 = vpow.pop %v1054
    %v1056 = vmul.f32 %v1027, 1.442695
    %v1057 = vpow.pop %v1056
    %v1058 = vmul.f32 %v1028, 1.442695
    %v1059 = vpow.pop %v1058
    %v1060 = vmul.f32 %v1029, 1.442695
    %v1061 = vpow.pop %v1060
    %1078 = vrot.lane.b32.xlu0 %v1031, 1
    %v1079 = vpop.permute.xlu0 %1078
    %1080 = vrot.lane.b32.xlu0 %v1033, 1
    %v1081 = vpop.permute.xlu0 %1080
    %1082 = vrot.lane.b32.xlu0 %v1035, 1
    %v1083 = vpop.permute.xlu0 %1082
    %1084 = vrot.lane.b32.xlu0 %v1037, 1
    %v1085 = vpop.permute.xlu0 %1084
    %1086 = vrot.lane.b32.xlu0 %v1039, 1
    %v1087 = vpop.permute.xlu0 %1086
    %1088 = vrot.lane.b32.xlu0 %v1041, 1
    %v1089 = vpop.permute.xlu0 %1088
    %1090 = vrot.lane.b32.xlu0 %v1043, 1
    %v1091 = vpop.permute.xlu0 %1090
    %1092 = vrot.lane.b32.xlu0 %v1045, 1
    %v1093 = vpop.permute.xlu0 %1092
    %1094 = vrot.lane.b32.xlu0 %v1047, 1
    %v1095 = vpop.permute.xlu0 %1094
    %1096 = vrot.lane.b32.xlu0 %v1049, 1
    %v1097 = vpop.permute.xlu0 %1096
    %1098 = vrot.lane.b32.xlu0 %v1051, 1
    %v1099 = vpop.permute.xlu0 %1098
    %1100 = vrot.lane.b32.xlu0 %v1053, 1
    %v1101 = vpop.permute.xlu0 %1100
    %1102 = vrot.lane.b32.xlu0 %v1055, 1
    %v1103 = vpop.permute.xlu0 %1102
    %1104 = vrot.lane.b32.xlu0 %v1057, 1
    %v1105 = vpop.permute.xlu0 %1104
    %1106 = vrot.lane.b32.xlu0 %v1059, 1
    %v1107 = vpop.permute.xlu0 %1106
    %1108 = vrot.lane.b32.xlu0 %v1061, 1
    %v1109 = vpop.permute.xlu0 %1108
    %v1126 = vmul.f32 %v581, %v1079
    %v1127 = vmul.f32 %v582, %v1081
    %v1128 = vmul.f32 %v583, %v1083
    %v1129 = vmul.f32 %v584, %v1085
    %v1130 = vmul.f32 %v585, %v1087
    %v1131 = vmul.f32 %v586, %v1089
    %v1132 = vmul.f32 %v587, %v1091
    %v1133 = vmul.f32 %v588, %v1093
    %v1134 = vmul.f32 %v589, %v1095
    %v1135 = vmul.f32 %v590, %v1097
    %v1136 = vmul.f32 %v591, %v1099
    %v1137 = vmul.f32 %v592, %v1101
    %v1138 = vmul.f32 %v593, %v1103
    %v1139 = vmul.f32 %v594, %v1105
    %v1140 = vmul.f32 %v595, %v1107
    %v1141 = vmul.f32 %v596, %v1109
    %1142 = vadd.xlane.f32.xlu0 %v965
    %v1143 = vpop.xlane.xlu0 %1142
    %1144 = vadd.xlane.f32.xlu0 %v966
    %v1145 = vpop.xlane.xlu0 %1144
    %1146 = vadd.xlane.f32.xlu0 %v967
    %v1147 = vpop.xlane.xlu0 %1146
    %1148 = vadd.xlane.f32.xlu0 %v968
    %v1149 = vpop.xlane.xlu0 %1148
    %1150 = vadd.xlane.f32.xlu0 %v969
    %v1151 = vpop.xlane.xlu0 %1150
    %1152 = vadd.xlane.f32.xlu0 %v970
    %v1153 = vpop.xlane.xlu0 %1152
    %1154 = vadd.xlane.f32.xlu0 %v971
    %v1155 = vpop.xlane.xlu0 %1154
    %1156 = vadd.xlane.f32.xlu0 %v972
    %v1157 = vpop.xlane.xlu0 %1156
    %1158 = vadd.xlane.f32.xlu0 %v973
    %v1159 = vpop.xlane.xlu0 %1158
    %1160 = vadd.xlane.f32.xlu0 %v974
    %v1161 = vpop.xlane.xlu0 %1160
    %1162 = vadd.xlane.f32.xlu0 %v975
    %v1163 = vpop.xlane.xlu0 %1162
    %1164 = vadd.xlane.f32.xlu0 %v976
    %v1165 = vpop.xlane.xlu0 %1164
    %1166 = vadd.xlane.f32.xlu0 %v977
    %v1167 = vpop.xlane.xlu0 %1166
    %1168 = vadd.xlane.f32.xlu0 %v978
    %v1169 = vpop.xlane.xlu0 %1168
    %1170 = vadd.xlane.f32.xlu0 %v979
    %v1171 = vpop.xlane.xlu0 %1170
    %1172 = vadd.xlane.f32.xlu0 %v980
    %v1173 = vpop.xlane.xlu0 %1172
    %v1174 = vadd.f32 %v1126, %v1143
    %v1175 = vadd.f32 %v1127, %v1145
    %v1176 = vadd.f32 %v1128, %v1147
    %v1177 = vadd.f32 %v1129, %v1149
    %v1178 = vadd.f32 %v1130, %v1151
    %v1179 = vadd.f32 %v1131, %v1153
    %v1180 = vadd.f32 %v1132, %v1155
    %v1181 = vadd.f32 %v1133, %v1157
    %v1182 = vadd.f32 %v1134, %v1159
    %v1183 = vadd.f32 %v1135, %v1161
    %v1184 = vadd.f32 %v1136, %v1163
    %v1185 = vadd.f32 %v1137, %v1165
    %v1186 = vadd.f32 %v1138, %v1167
    %v1187 = vadd.f32 %v1139, %v1169
    %v1188 = vadd.f32 %v1140, %v1171
    %v1189 = vadd.f32 %v1141, %v1173
    %vm1190 = vcmask 15368
    %1191 = vst.msk [vmem:[#allocation2] sm:$0xff] %vm1190, %v1174
    %1192 = vst.msk [vmem:[#allocation2 + $0x8] sm:$0xff] %vm1190, %v1175
    %1193 = vst.msk [vmem:[#allocation2 + $0x10] sm:$0xff] %vm1190, %v1176
    %1194 = vst.msk [vmem:[#allocation2 + $0x18] sm:$0xff] %vm1190, %v1177
    %1195 = vst.msk [vmem:[#allocation2 + $0x20] sm:$0xff] %vm1190, %v1178
    %1196 = vst.msk [vmem:[#allocation2 + $0x28] sm:$0xff] %vm1190, %v1179
    %1197 = vst.msk [vmem:[#allocation2 + $0x30] sm:$0xff] %vm1190, %v1180
    %1198 = vst.msk [vmem:[#allocation2 + $0x38] sm:$0xff] %vm1190, %v1181
    %1199 = vst.msk [vmem:[#allocation2 + $0x40] sm:$0xff] %vm1190, %v1182
    %1200 = vst.msk [vmem:[#allocation2 + $0x48] sm:$0xff] %vm1190, %v1183
    %1201 = vst.msk [vmem:[#allocation2 + $0x50] sm:$0xff] %vm1190, %v1184
    %1202 = vst.msk [vmem:[#allocation2 + $0x58] sm:$0xff] %vm1190, %v1185
    %1203 = vst.msk [vmem:[#allocation2 + $0x60] sm:$0xff] %vm1190, %v1186
    %1204 = vst.msk [vmem:[#allocation2 + $0x68] sm:$0xff] %vm1190, %v1187
    %1205 = vst.msk [vmem:[#allocation2 + $0x70] sm:$0xff] %vm1190, %v1188
    %1206 = vst.msk [vmem:[#allocation2 + $0x78] sm:$0xff] %vm1190, %v1189
    %vm1207 = vcmask 23568
    %1208 = vst.msk [vmem:[#allocation2] sm:$0xff] %vm1207, %v709
    %1209 = vst.msk [vmem:[#allocation2 + $0x8] sm:$0xff] %vm1207, %v710
    %1210 = vst.msk [vmem:[#allocation2 + $0x10] sm:$0xff] %vm1207, %v711
    %1211 = vst.msk [vmem:[#allocation2 + $0x18] sm:$0xff] %vm1207, %v712
    %1212 = vst.msk [vmem:[#allocation2 + $0x20] sm:$0xff] %vm1207, %v713
    %1213 = vst.msk [vmem:[#allocation2 + $0x28] sm:$0xff] %vm1207, %v714
    %1214 = vst.msk [vmem:[#allocation2 + $0x30] sm:$0xff] %vm1207, %v715
    %1215 = vst.msk [vmem:[#allocation2 + $0x38] sm:$0xff] %vm1207, %v716
    %1216 = vst.msk [vmem:[#allocation2 + $0x40] sm:$0xff] %vm1207, %v717
    %1217 = vst.msk [vmem:[#allocation2 + $0x48] sm:$0xff] %vm1207, %v718
    %1218 = vst.msk [vmem:[#allocation2 + $0x50] sm:$0xff] %vm1207, %v719
    %1219 = vst.msk [vmem:[#allocation2 + $0x58] sm:$0xff] %vm1207, %v720
    %1220 = vst.msk [vmem:[#allocation2 + $0x60] sm:$0xff] %vm1207, %v721
    %1221 = vst.msk [vmem:[#allocation2 + $0x68] sm:$0xff] %vm1207, %v722
    %1222 = vst.msk [vmem:[#allocation2 + $0x70] sm:$0xff] %vm1207, %v723
    %1223 = vst.msk [vmem:[#allocation2 + $0x78] sm:$0xff] %vm1207, %v724
    %v1224 = vsub.f32 %v581, %v709
    %v1225 = vsub.f32 %v582, %v710
    %v1226 = vsub.f32 %v583, %v711
    %v1227 = vsub.f32 %v584, %v712
    %v1228 = vsub.f32 %v585, %v713
    %v1229 = vsub.f32 %v586, %v714
    %v1230 = vsub.f32 %v587, %v715
    %v1231 = vsub.f32 %v588, %v716
    %v1232 = vsub.f32 %v589, %v717
    %v1233 = vsub.f32 %v590, %v718
    %v1234 = vsub.f32 %v591, %v719
    %v1235 = vsub.f32 %v592, %v720
    %v1236 = vsub.f32 %v593, %v721
    %v1237 = vsub.f32 %v594, %v722
    %v1238 = vsub.f32 %v595, %v723
    %v1239 = vsub.f32 %v596, %v724
    %v1240 = vmul.f32 %v1224, 1.442695
    %v1241 = vpow.pop %v1240
    %v1242 = vmul.f32 %v1225, 1.442695
    %v1243 = vpow.pop %v1242
    %v1244 = vmul.f32 %v1226, 1.442695
    %v1245 = vpow.pop %v1244
    %v1246 = vmul.f32 %v1227, 1.442695
    %v1247 = vpow.pop %v1246
    %v1248 = vmul.f32 %v1228, 1.442695
    %v1249 = vpow.pop %v1248
    %v1250 = vmul.f32 %v1229, 1.442695
    %v1251 = vpow.pop %v1250
    %v1252 = vmul.f32 %v1230, 1.442695
    %v1253 = vpow.pop %v1252
    %v1254 = vmul.f32 %v1231, 1.442695
    %v1255 = vpow.pop %v1254
    %v1256 = vmul.f32 %v1232, 1.442695
    %v1257 = vpow.pop %v1256
    %v1258 = vmul.f32 %v1233, 1.442695
    %v1259 = vpow.pop %v1258
    %v1260 = vmul.f32 %v1234, 1.442695
    %v1261 = vpow.pop %v1260
    %v1262 = vmul.f32 %v1235, 1.442695
    %v1263 = vpow.pop %v1262
    %v1264 = vmul.f32 %v1236, 1.442695
    %v1265 = vpow.pop %v1264
    %v1266 = vmul.f32 %v1237, 1.442695
    %v1267 = vpow.pop %v1266
    %v1268 = vmul.f32 %v1238, 1.442695
    %v1269 = vpow.pop %v1268
    %v1270 = vmul.f32 %v1239, 1.442695
    %v1271 = vpow.pop %v1270
    %1288 = vrot.lane.b32.xlu0 %v1241, 1
    %v1289 = vpop.permute.xlu0 %1288
    %1290 = vrot.lane.b32.xlu0 %v1243, 1
    %v1291 = vpop.permute.xlu0 %1290
    %1292 = vrot.lane.b32.xlu0 %v1245, 1
    %v1293 = vpop.permute.xlu0 %1292
    %1294 = vrot.lane.b32.xlu0 %v1247, 1
    %v1295 = vpop.permute.xlu0 %1294
    %1296 = vrot.lane.b32.xlu0 %v1249, 1
    %v1297 = vpop.permute.xlu0 %1296
    %1298 = vrot.lane.b32.xlu0 %v1251, 1
    %v1299 = vpop.permute.xlu0 %1298
    %1300 = vrot.lane.b32.xlu0 %v1253, 1
    %v1301 = vpop.permute.xlu0 %1300
    %1302 = vrot.lane.b32.xlu0 %v1255, 1
    %v1303 = vpop.permute.xlu0 %1302
    %1304 = vrot.lane.b32.xlu0 %v1257, 1
    %v1305 = vpop.permute.xlu0 %1304
    %1306 = vrot.lane.b32.xlu0 %v1259, 1
    %v1307 = vpop.permute.xlu0 %1306
    %1308 = vrot.lane.b32.xlu0 %v1261, 1
    %v1309 = vpop.permute.xlu0 %1308
    %1310 = vrot.lane.b32.xlu0 %v1263, 1
    %v1311 = vpop.permute.xlu0 %1310
    %1312 = vrot.lane.b32.xlu0 %v1265, 1
    %v1313 = vpop.permute.xlu0 %1312
    %1314 = vrot.lane.b32.xlu0 %v1267, 1
    %v1315 = vpop.permute.xlu0 %1314
    %1316 = vrot.lane.b32.xlu0 %v1269, 1
    %v1317 = vpop.permute.xlu0 %1316
    %1318 = vrot.lane.b32.xlu0 %v1271, 1
    %v1319 = vpop.permute.xlu0 %1318
    %v1336 = vmul.f32 %v581, %v1289
    %v1337 = vmul.f32 %v582, %v1291
    %v1338 = vmul.f32 %v583, %v1293
    %v1339 = vmul.f32 %v584, %v1295
    %v1340 = vmul.f32 %v585, %v1297
    %v1341 = vmul.f32 %v586, %v1299
    %v1342 = vmul.f32 %v587, %v1301
    %v1343 = vmul.f32 %v588, %v1303
    %v1344 = vmul.f32 %v589, %v1305
    %v1345 = vmul.f32 %v590, %v1307
    %v1346 = vmul.f32 %v591, %v1309
    %v1347 = vmul.f32 %v592, %v1311
    %v1348 = vmul.f32 %v593, %v1313
    %v1349 = vmul.f32 %v594, %v1315
    %v1350 = vmul.f32 %v595, %v1317
    %v1351 = vmul.f32 %v596, %v1319
    %1352 = vadd.xlane.f32.xlu0 %v981
    %v1353 = vpop.xlane.xlu0 %1352
    %1354 = vadd.xlane.f32.xlu0 %v982
    %v1355 = vpop.xlane.xlu0 %1354
    %1356 = vadd.xlane.f32.xlu0 %v983
    %v1357 = vpop.xlane.xlu0 %1356
    %1358 = vadd.xlane.f32.xlu0 %v984
    %v1359 = vpop.xlane.xlu0 %1358
    %1360 = vadd.xlane.f32.xlu0 %v985
    %v1361 = vpop.xlane.xlu0 %1360
    %1362 = vadd.xlane.f32.xlu0 %v986
    %v1363 = vpop.xlane.xlu0 %1362
    %1364 = vadd.xlane.f32.xlu0 %v987
    %v1365 = vpop.xlane.xlu0 %1364
    %1366 = vadd.xlane.f32.xlu0 %v988
    %v1367 = vpop.xlane.xlu0 %1366
    %1368 = vadd.xlane.f32.xlu0 %v989
    %v1369 = vpop.xlane.xlu0 %1368
    %1370 = vadd.xlane.f32.xlu0 %v990
    %v1371 = vpop.xlane.xlu0 %1370
    %1372 = vadd.xlane.f32.xlu0 %v991
    %v1373 = vpop.xlane.xlu0 %1372
    %1374 = vadd.xlane.f32.xlu0 %v992
    %v1375 = vpop.xlane.xlu0 %1374
    %1376 = vadd.xlane.f32.xlu0 %v993
    %v1377 = vpop.xlane.xlu0 %1376
    %1378 = vadd.xlane.f32.xlu0 %v994
    %v1379 = vpop.xlane.xlu0 %1378
    %1380 = vadd.xlane.f32.xlu0 %v995
    %v1381 = vpop.xlane.xlu0 %1380
    %1382 = vadd.xlane.f32.xlu0 %v996
    %v1383 = vpop.xlane.xlu0 %1382
    %v1384 = vadd.f32 %v1336, %v1353
    %v1385 = vadd.f32 %v1337, %v1355
    %v1386 = vadd.f32 %v1338, %v1357
    %v1387 = vadd.f32 %v1339, %v1359
    %v1388 = vadd.f32 %v1340, %v1361
    %v1389 = vadd.f32 %v1341, %v1363
    %v1390 = vadd.f32 %v1342, %v1365
    %v1391 = vadd.f32 %v1343, %v1367
    %v1392 = vadd.f32 %v1344, %v1369
    %v1393 = vadd.f32 %v1345, %v1371
    %v1394 = vadd.f32 %v1346, %v1373
    %v1395 = vadd.f32 %v1347, %v1375
    %v1396 = vadd.f32 %v1348, %v1377
    %v1397 = vadd.f32 %v1349, %v1379
    %v1398 = vadd.f32 %v1350, %v1381
    %v1399 = vadd.f32 %v1351, %v1383
    %vm1400 = vcmask 31768
    %1401 = vst.msk [vmem:[#allocation2] sm:$0xff] %vm1400, %v1384
    %1402 = vst.msk [vmem:[#allocation2 + $0x8] sm:$0xff] %vm1400, %v1385
    %1403 = vst.msk [vmem:[#allocation2 + $0x10] sm:$0xff] %vm1400, %v1386
    %1404 = vst.msk [vmem:[#allocation2 + $0x18] sm:$0xff] %vm1400, %v1387
    %1405 = vst.msk [vmem:[#allocation2 + $0x20] sm:$0xff] %vm1400, %v1388
    %1406 = vst.msk [vmem:[#allocation2 + $0x28] sm:$0xff] %vm1400, %v1389
    %1407 = vst.msk [vmem:[#allocation2 + $0x30] sm:$0xff] %vm1400, %v1390
    %1408 = vst.msk [vmem:[#allocation2 + $0x38] sm:$0xff] %vm1400, %v1391
    %1409 = vst.msk [vmem:[#allocation2 + $0x40] sm:$0xff] %vm1400, %v1392
    %1410 = vst.msk [vmem:[#allocation2 + $0x48] sm:$0xff] %vm1400, %v1393
    %1411 = vst.msk [vmem:[#allocation2 + $0x50] sm:$0xff] %vm1400, %v1394
    %1412 = vst.msk [vmem:[#allocation2 + $0x58] sm:$0xff] %vm1400, %v1395
    %1413 = vst.msk [vmem:[#allocation2 + $0x60] sm:$0xff] %vm1400, %v1396
    %1414 = vst.msk [vmem:[#allocation2 + $0x68] sm:$0xff] %vm1400, %v1397
    %1415 = vst.msk [vmem:[#allocation2 + $0x70] sm:$0xff] %vm1400, %v1398
    %1416 = vst.msk [vmem:[#allocation2 + $0x78] sm:$0xff] %vm1400, %v1399
    // Predicated region
    $region26: #{tpu_custom_call.1} parent=1 // pred_check
      %p1417 = pneg %p33
    $region27: #{tpu_custom_call.1} parent=1 // pred_check_branch
      %1419 = sbr.rel (%p1417) target = $region29
    $region28: #{tpu_custom_call.1} parent=1 // pred_region
      %v1420 = vld [vmem:[#allocation2] sm:$0xff]
      %v1421 = vld [vmem:[#allocation2 + $0x8] sm:$0xff]
      %v1422 = vld [vmem:[#allocation2 + $0x10] sm:$0xff]
      %v1423 = vld [vmem:[#allocation2 + $0x18] sm:$0xff]
      %v1424 = vld [vmem:[#allocation2 + $0x20] sm:$0xff]
      %v1425 = vld [vmem:[#allocation2 + $0x28] sm:$0xff]
      %v1426 = vld [vmem:[#allocation2 + $0x30] sm:$0xff]
      %v1427 = vld [vmem:[#allocation2 + $0x38] sm:$0xff]
      %v1428 = vld [vmem:[#allocation2 + $0x40] sm:$0xff]
      %v1429 = vld [vmem:[#allocation2 + $0x48] sm:$0xff]
      %v1430 = vld [vmem:[#allocation2 + $0x50] sm:$0xff]
      %v1431 = vld [vmem:[#allocation2 + $0x58] sm:$0xff]
      %v1432 = vld [vmem:[#allocation2 + $0x60] sm:$0xff]
      %v1433 = vld [vmem:[#allocation2 + $0x68] sm:$0xff]
      %v1434 = vld [vmem:[#allocation2 + $0x70] sm:$0xff]
      %v1435 = vld [vmem:[#allocation2 + $0x78] sm:$0xff]
      %vm1436 = vcmask 31744
      %1437 = vst.msk [vmem:[%s4] sm:$0xff] %vm1436, %v1420
      %1438 = vst.msk [vmem:[%s4 + $0x8] sm:$0xff] %vm1436, %v1421
      %1439 = vst.msk [vmem:[%s4 + $0x10] sm:$0xff] %vm1436, %v1422
      %1440 = vst.msk [vmem:[%s4 + $0x18] sm:$0xff] %vm1436, %v1423
      %1441 = vst.msk [vmem:[%s4 + $0x20] sm:$0xff] %vm1436, %v1424
      %1442 = vst.msk [vmem:[%s4 + $0x28] sm:$0xff] %vm1436, %v1425
      %1443 = vst.msk [vmem:[%s4 + $0x30] sm:$0xff] %vm1436, %v1426
      %1444 = vst.msk [vmem:[%s4 + $0x38] sm:$0xff] %vm1436, %v1427
      %1445 = vst.msk [vmem:[%s4 + $0x40] sm:$0xff] %vm1436, %v1428
      %1446 = vst.msk [vmem:[%s4 + $0x48] sm:$0xff] %vm1436, %v1429
      %1447 = vst.msk [vmem:[%s4 + $0x50] sm:$0xff] %vm1436, %v1430
      %1448 = vst.msk [vmem:[%s4 + $0x58] sm:$0xff] %vm1436, %v1431
      %1449 = vst.msk [vmem:[%s4 + $0x60] sm:$0xff] %vm1436, %v1432
      %1450 = vst.msk [vmem:[%s4 + $0x68] sm:$0xff] %vm1436, %v1433
      %1451 = vst.msk [vmem:[%s4 + $0x70] sm:$0xff] %vm1436, %v1434
      %1452 = vst.msk [vmem:[%s4 + $0x78] sm:$0xff] %vm1436, %v1435
    $region29: #{tpu_custom_call.1} parent=1 // pred_fallthru
      _
    // Predicated region
    $region30: #{tpu_custom_call.1} parent=1 // pred_check
      _
    $region31: #{tpu_custom_call.1} parent=1 // pred_check_branch
      %1454 = sbr.rel (0) target = $region33
    $region32: #{tpu_custom_call.1} parent=1 // pred_region
      _
    $region33: #{tpu_custom_call.1} parent=1 // pred_fallthru
      _
    // Predicated region
    $region34: #{tpu_custom_call.1} parent=1 // pred_check
      _
    $region35: #{tpu_custom_call.1} parent=1 // pred_check_branch
      %1456 = sbr.rel (0) target = $region37
    $region36: #{tpu_custom_call.1} parent=1 // pred_region
      _
    $region37: #{tpu_custom_call.1} parent=1 // pred_fallthru
      _
    %1457 = vsyncpa [#allocation4], 1

</llo_original>
